<compile_context>
chip_gen: v6e
topology: v6e:2x2x1
jax: 0.10.0
libtpu: 0.0.40
codegen_flags: <defaults>
</compile_context>

<pallas_src>
import functools

import jax
import jax.numpy as jnp
from jax.experimental import pallas as pl
from jax.experimental.pallas import tpu as pltpu

H_DIM = 7
INPUT_SIZE = 5
N_MIXTURES = 2
OUT_M_DIM = 3 * 3 * N_MIXTURES   # 18
OUT_R_DIM = 1 * 3 * N_MIXTURES   # 6
OUT_TOTAL = OUT_M_DIM + OUT_R_DIM
GATE_PITCH = 128                 # one full lane tile per GRU gate
HID_PITCH = 8                    # padded hidden contraction dim (K) for matmuls
HEAD_PITCH = 128                 # lane-dense padded width of the combined heads output


def env_model_kernel(x_ref,        # (T, B, I)        f32  time-major input
                     h0_ref,       # (1, GP)          f32  h0 row (lanes >= H are 0)
                     w_ih_ref,     # (I, 3*GP)        f32  gate-padded W_ih^T
                     w_hh_ref,     # (KH, 3*GP)       bf16 K-trimmed, gate-padded W_hh^T
                     b_gi_ref,     # (1, 3*GP)        f32  b_ih (+ b_hh for r,z), padded
                     b_hhn_ref,    # (1, GP)          f32  b_hh of the n gate, padded
                     w_hd_ref,     # (KH, HP)         f32  [out_m.W^T | out_r.W^T], padded
                     b_hd_ref,     # (1, HP)          f32  [out_m.b | out_r.b], padded
                     heads_ref,    # (T*B, HP)        f32  combined heads (time-major rows)
                     h_last_ref):  # (B, GP)          f32  last hidden state (lane-padded)
    T, B, I = x_ref.shape
    GP = b_hhn_ref.shape[1]
    KH = w_hh_ref.shape[0]

    w_hh = w_hh_ref[...]                       # (KH, 3*GP) bf16 — ~3 vregs, held in regs
    b_hhn = b_hhn_ref[...]

    # ---- hoisted input-gate matmul: one MXU op for all timesteps, bias folded ----
    x_flat = x_ref[...].reshape(T * B, I)                                 # time-major rows
    gi_all = (jnp.dot(x_flat, w_ih_ref[...], preferred_element_type=jnp.float32)
              + b_gi_ref[...])                                            # (T*B, 3*GP)

    # ---- serial GRU recurrence, fully unrolled (T static & small) ----
    h = jnp.broadcast_to(h0_ref[...], (B, GP))      # padded lanes are 0 and stay 0
    hs = []                                         # per-step hidden states, in registers
    for t in range(T):
        gi = gi_all[t * B:(t + 1) * B, :]           # contiguous sublane pair (time-major)
        # only recurrent matmul on the serial chain: K=8, bf16 operands, f32 accumulate
        gh = jnp.dot(h[:, :KH].astype(jnp.bfloat16), w_hh,
                     preferred_element_type=jnp.float32)                  # (B, 3*GP)
        # sigmoid via a single native EUP tanh: sigmoid(a) = 0.5*(tanh(0.5*a)+1)
        r = 0.5 * (jnp.tanh(0.5 * (gi[:, 0:GP] + gh[:, 0:GP])) + 1.0)
        z = 0.5 * (jnp.tanh(0.5 * (gi[:, GP:2 * GP] + gh[:, GP:2 * GP])) + 1.0)
        n = jnp.tanh(gi[:, 2 * GP:3 * GP] + r * (gh[:, 2 * GP:3 * GP] + b_hhn))
        h = n + z * (h - n)                          # 3-op hidden update
        hs.append(h[:, :KH])                         # one vreg-slice per step, stays in regs

    # ---- output heads: ONE matmul over all (t, b) hidden states, one dense store ----
    all_h = jnp.concatenate(hs, axis=0)              # (T*B, KH), time-major
    heads_ref[...] = (jnp.dot(all_h, w_hd_ref[...],
                              preferred_element_type=jnp.float32)
                      + b_hd_ref[...])               # (T*B, HP), lane-dense unmasked store
    h_last_ref[...] = h


def prepare_kernel_params(params):
    """Pad torch-layout params to the kernel layout. Run ONCE and reuse per call."""
    H, I, GP, KH, HP = H_DIM, INPUT_SIZE, GATE_PITCH, HID_PITCH, HEAD_PITCH
    w_ih = params["gru_w_ih"]            # (3H, I)  torch weight_ih_l0 (gates r,z,n)
    w_hh = params["gru_w_hh"]            # (3H, H)  torch weight_hh_l0
    b_ih = params["gru_b_ih"]            # (3H,)
    b_hh = params["gru_b_hh"]            # (3H,)

    w_ih_p = jnp.zeros((I, 3 * GP), jnp.float32)
    w_hh_p = jnp.zeros((KH, 3 * GP), jnp.float32)   # K trimmed to 8 (rows >= H stay 0)
    for g in range(3):
        w_ih_p = w_ih_p.at[:, g * GP:g * GP + H].set(w_ih[g * H:(g + 1) * H, :].T)
        w_hh_p = w_hh_p.at[:H, g * GP:g * GP + H].set(w_hh[g * H:(g + 1) * H, :].T)

    # b_ih for all gates + b_hh for the r/z gates go into the precomputed gi;
    # b_hh of the n gate must stay inside the loop (it sits inside r * (...)).
    b_gi_p = jnp.zeros((1, 3 * GP), jnp.float32)
    b_gi_p = b_gi_p.at[0, 0 * GP:0 * GP + H].set(b_ih[0 * H:1 * H] + b_hh[0 * H:1 * H])
    b_gi_p = b_gi_p.at[0, 1 * GP:1 * GP + H].set(b_ih[1 * H:2 * H] + b_hh[1 * H:2 * H])
    b_gi_p = b_gi_p.at[0, 2 * GP:2 * GP + H].set(b_ih[2 * H:3 * H])
    b_hhn_p = jnp.zeros((1, GP), jnp.float32).at[0, :H].set(b_hh[2 * H:3 * H])

    # h0 = Linear(1, H, bias=False)(ones) -> each row equals weight column 0.
    h0_p = jnp.zeros((1, GP), jnp.float32).at[0, :H].set(params["h0_w"][:, 0])

    # Concatenated output heads (out_m | out_r), padded to a lane-dense 128 width.
    w_hd_p = jnp.zeros((KH, HP), jnp.float32)
    w_hd_p = w_hd_p.at[:H, :OUT_M_DIM].set(params["out_m_w"].T)
    w_hd_p = w_hd_p.at[:H, OUT_M_DIM:OUT_TOTAL].set(params["out_r_w"].T)
    b_hd_p = jnp.zeros((1, HP), jnp.float32)
    b_hd_p = b_hd_p.at[0, :OUT_M_DIM].set(params["out_m_b"])
    b_hd_p = b_hd_p.at[0, OUT_M_DIM:OUT_TOTAL].set(params["out_r_b"])

    return dict(
        h0_p=h0_p,
        w_ih_p=w_ih_p,
        w_hh_p=w_hh_p.astype(jnp.bfloat16),   # bf16 operand for the critical-path matmul
        b_gi_p=b_gi_p,
        b_hhn_p=b_hhn_p,
        w_hd_p=w_hd_p,
        b_hd_p=b_hd_p,
    )


@jax.jit
def environment_model_forward(x, kernel_params):
    """x: (B, T, INPUT_SIZE) f32; kernel_params: output of prepare_kernel_params."""
    B, T, I = x.shape
    x_tm = jnp.swapaxes(x, 0, 1)                     # (T, B, I): time-major for the kernel

    vmem = pl.BlockSpec(memory_space=pltpu.MemorySpace.VMEM)
    heads, h_last = pl.pallas_call(
        env_model_kernel,
        out_shape=(
            jax.ShapeDtypeStruct((T * B, HEAD_PITCH), jnp.float32),
            jax.ShapeDtypeStruct((B, GATE_PITCH), jnp.float32),
        ),
        in_specs=[vmem] * 8,
        out_specs=(vmem, vmem),
    )(
        x_tm,
        kernel_params["h0_p"], kernel_params["w_ih_p"], kernel_params["w_hh_p"],
        kernel_params["b_gi_p"], kernel_params["b_hhn_p"],
        kernel_params["w_hd_p"], kernel_params["b_hd_p"],
    )

    # Tiny wrapper-side layout plumbing (a few KiB): split the combined lane-dense
    # heads output into out_m / out_r and restore batch-first ordering.
    heads = jnp.swapaxes(heads.reshape(T, B, HEAD_PITCH), 0, 1)   # (B, T, HP)
    out_m = heads[:, :, :OUT_M_DIM]
    out_r = heads[:, :, OUT_M_DIM:OUT_TOTAL]
    h_n = h_last[None, :, :H_DIM]                                  # (1, B, H) like torch GRU
    return out_m, out_r, h_n


def init_params(key):
    """Deterministic parameter init in torch layout (uniform +/- 1/sqrt(H))."""
    k = 1.0 / jnp.sqrt(jnp.float32(H_DIM))
    keys = jax.random.split(key, 9)
    u = lambda kk, shape: jax.random.uniform(kk, shape, jnp.float32, -k, k)
    return {
        "gru_w_ih": u(keys[0], (3 * H_DIM, INPUT_SIZE)),   # weight_ih_l0 (gates r,z,n)
        "gru_w_hh": u(keys[1], (3 * H_DIM, H_DIM)),        # weight_hh_l0
        "gru_b_ih": u(keys[2], (3 * H_DIM,)),
        "gru_b_hh": u(keys[3], (3 * H_DIM,)),
        "h0_w": u(keys[4], (H_DIM, 1)),                    # Linear(1, H, bias=False).weight
        "out_m_w": u(keys[5], (OUT_M_DIM, H_DIM)),
        "out_m_b": u(keys[6], (OUT_M_DIM,)),
        "out_r_w": u(keys[7], (OUT_R_DIM, H_DIM)),
        "out_r_b": u(keys[8], (OUT_R_DIM,)),
    }


def reference_forward(x, params):
    """Pure-JAX f32 reference matching torch.nn.GRU / Linear semantics."""
    B, T, _ = x.shape
    H = H_DIM
    w_ih, w_hh = params["gru_w_ih"], params["gru_w_hh"]
    b_ih, b_hh = params["gru_b_ih"], params["gru_b_hh"]
    h = jnp.broadcast_to(params["h0_w"][:, 0], (B, H))
    hs = []
    for t in range(T):
        gi = x[:, t, :] @ w_ih.T + b_ih
        gh = h @ w_hh.T + b_hh
        r = jax.nn.sigmoid(gi[:, :H] + gh[:, :H])
        z = jax.nn.sigmoid(gi[:, H:2 * H] + gh[:, H:2 * H])
        n = jnp.tanh(gi[:, 2 * H:] + r * gh[:, 2 * H:])
        h = (1.0 - z) * n + z * h
        hs.append(h)
    all_h = jnp.stack(hs, axis=1)                          # (B, T, H)
    out_m = all_h @ params["out_m_w"].T + params["out_m_b"]
    out_r = all_h @ params["out_r_w"].T + params["out_r_b"]
    return out_m, out_r, h[None]


if __name__ == "__main__":
    key = jax.random.PRNGKey(0)
    k_param, k_x = jax.random.split(key)

    batch_size, seq_len = 2, 8
    params = init_params(k_param)
    x = jax.random.normal(k_x, (batch_size, seq_len, INPUT_SIZE), jnp.float32)

    # Padded kernel params prepared once (outside the per-call jit) and reused.
    kernel_params = prepare_kernel_params(params)
    kernel_params = jax.tree_util.tree_map(jax.block_until_ready, kernel_params)

    out_m, out_r, h_last = environment_model_forward(x, kernel_params)
    jax.block_until_ready((out_m, out_r, h_last))

    # Sanity check vs the pure-f32 JAX reference. The recurrent matmul uses bf16
    # MXU operands (f32 accumulate), so allow a slightly looser tolerance.
    ref_m, ref_r, ref_h = reference_forward(x, params)
    assert out_m.shape == (batch_size, seq_len, OUT_M_DIM)
    assert out_r.shape == (batch_size, seq_len, OUT_R_DIM)
    assert h_last.shape == (1, batch_size, H_DIM)
    assert jnp.allclose(out_m, ref_m, rtol=1e-2, atol=2e-2)
    assert jnp.allclose(out_r, ref_r, rtol=1e-2, atol=2e-2)
    assert jnp.allclose(h_last, ref_h, rtol=1e-2, atol=2e-2)

    print("KERNEL_OK")
</pallas_src>

<mosaic_0001>
module attributes {stable_mosaic.version = 11 : i64} {
  func.func @env_model_kernel(%arg0: memref<8x2x5xf32, #tpu.memory_space<vmem>>, %arg1: memref<1x128xf32, #tpu.memory_space<vmem>>, %arg2: memref<5x384xf32, #tpu.memory_space<vmem>>, %arg3: memref<8x384xbf16, #tpu.memory_space<vmem>>, %arg4: memref<1x384xf32, #tpu.memory_space<vmem>>, %arg5: memref<1x128xf32, #tpu.memory_space<vmem>>, %arg6: memref<8x128xf32, #tpu.memory_space<vmem>>, %arg7: memref<1x128xf32, #tpu.memory_space<vmem>>, %arg8: memref<16x128xf32, #tpu.memory_space<vmem>>, %arg9: memref<2x128xf32, #tpu.memory_space<vmem>>) attributes {dimension_semantics = [], scalar_prefetch = 0 : i64, scratch_operands = 0 : i64, tpu.core_type = #tpu.core_type<tc>} {
    %c0 = arith.constant 0 : index
    %c0_0 = arith.constant 0 : index
    %0 = vector.load %arg3[%c0, %c0_0] : memref<8x384xbf16, #tpu.memory_space<vmem>>, vector<8x384xbf16>
    %c0_1 = arith.constant 0 : index
    %c0_2 = arith.constant 0 : index
    %1 = vector.load %arg5[%c0_1, %c0_2] : memref<1x128xf32, #tpu.memory_space<vmem>>, vector<1x128xf32>
    %c0_3 = arith.constant 0 : index
    %c0_4 = arith.constant 0 : index
    %c0_5 = arith.constant 0 : index
    %2 = vector.load %arg0[%c0_3, %c0_4, %c0_5] : memref<8x2x5xf32, #tpu.memory_space<vmem>>, vector<8x2x5xf32>
    %3 = vector.shape_cast %2 : vector<8x2x5xf32> to vector<16x5xf32>
    %c0_6 = arith.constant 0 : index
    %c0_7 = arith.constant 0 : index
    %4 = vector.load %arg2[%c0_6, %c0_7] : memref<5x384xf32, #tpu.memory_space<vmem>>, vector<5x384xf32>
    %cst = arith.constant dense<0.000000e+00> : vector<16x384xf32>
    %5 = tpu.matmul %3, %4, %cst {dimension_numbers = #tpu.dot_dimension_numbers<[1], [0], [0], [1], [0, 0, 1, 1], [], []>} : vector<16x5xf32>, vector<5x384xf32>, vector<16x384xf32> -> vector<16x384xf32>
    %c0_8 = arith.constant 0 : index
    %c0_9 = arith.constant 0 : index
    %6 = vector.load %arg4[%c0_8, %c0_9] : memref<1x384xf32, #tpu.memory_space<vmem>>, vector<1x384xf32>
    %7 = vector.broadcast %6 : vector<1x384xf32> to vector<16x384xf32>
    %8 = arith.addf %5, %7 : vector<16x384xf32>
    %c0_10 = arith.constant 0 : index
    %c0_11 = arith.constant 0 : index
    %9 = vector.load %arg1[%c0_10, %c0_11] : memref<1x128xf32, #tpu.memory_space<vmem>>, vector<1x128xf32>
    %10 = vector.shape_cast %9 : vector<1x128xf32> to vector<1x128xf32>
    %11 = vector.broadcast %10 : vector<1x128xf32> to vector<2x128xf32>
    %12 = vector.extract_strided_slice %8 {offsets = [0, 0], sizes = [2, 384], strides = [1, 1]} : vector<16x384xf32> to vector<2x384xf32>
    %13 = vector.extract_strided_slice %11 {offsets = [0, 0], sizes = [2, 8], strides = [1, 1]} : vector<2x128xf32> to vector<2x8xf32>
    %14 = arith.truncf %13 : vector<2x8xf32> to vector<2x8xbf16>
    %cst_12 = arith.constant dense<0.000000e+00> : vector<2x384xf32>
    %15 = tpu.matmul %14, %0, %cst_12 {dimension_numbers = #tpu.dot_dimension_numbers<[1], [0], [0], [1], [0, 0, 1, 1], [], []>} : vector<2x8xbf16>, vector<8x384xbf16>, vector<2x384xf32> -> vector<2x384xf32>
    %16 = vector.extract_strided_slice %12 {offsets = [0, 0], sizes = [2, 128], strides = [1, 1]} : vector<2x384xf32> to vector<2x128xf32>
    %17 = vector.extract_strided_slice %15 {offsets = [0, 0], sizes = [2, 128], strides = [1, 1]} : vector<2x384xf32> to vector<2x128xf32>
    %18 = arith.addf %16, %17 : vector<2x128xf32>
    %cst_13 = arith.constant 5.000000e-01 : f32
    %19 = vector.broadcast %cst_13 : f32 to vector<2x128xf32>
    %20 = arith.mulf %19, %18 : vector<2x128xf32>
    %21 = math.tanh %20 : vector<2x128xf32>
    %cst_14 = arith.constant 1.000000e+00 : f32
    %22 = vector.broadcast %cst_14 : f32 to vector<2x128xf32>
    %23 = arith.addf %21, %22 : vector<2x128xf32>
    %cst_15 = arith.constant 5.000000e-01 : f32
    %24 = vector.broadcast %cst_15 : f32 to vector<2x128xf32>
    %25 = arith.mulf %24, %23 : vector<2x128xf32>
    %26 = vector.extract_strided_slice %12 {offsets = [0, 128], sizes = [2, 128], strides = [1, 1]} : vector<2x384xf32> to vector<2x128xf32>
    %27 = vector.extract_strided_slice %15 {offsets = [0, 128], sizes = [2, 128], strides = [1, 1]} : vector<2x384xf32> to vector<2x128xf32>
    %28 = arith.addf %26, %27 : vector<2x128xf32>
    %cst_16 = arith.constant 5.000000e-01 : f32
    %29 = vector.broadcast %cst_16 : f32 to vector<2x128xf32>
    %30 = arith.mulf %29, %28 : vector<2x128xf32>
    %31 = math.tanh %30 : vector<2x128xf32>
    %cst_17 = arith.constant 1.000000e+00 : f32
    %32 = vector.broadcast %cst_17 : f32 to vector<2x128xf32>
    %33 = arith.addf %31, %32 : vector<2x128xf32>
    %cst_18 = arith.constant 5.000000e-01 : f32
    %34 = vector.broadcast %cst_18 : f32 to vector<2x128xf32>
    %35 = arith.mulf %34, %33 : vector<2x128xf32>
    %36 = vector.extract_strided_slice %12 {offsets = [0, 256], sizes = [2, 128], strides = [1, 1]} : vector<2x384xf32> to vector<2x128xf32>
    %37 = vector.extract_strided_slice %15 {offsets = [0, 256], sizes = [2, 128], strides = [1, 1]} : vector<2x384xf32> to vector<2x128xf32>
    %38 = vector.broadcast %1 : vector<1x128xf32> to vector<2x128xf32>
    %39 = arith.addf %37, %38 : vector<2x128xf32>
    %40 = arith.mulf %25, %39 : vector<2x128xf32>
    %41 = arith.addf %36, %40 : vector<2x128xf32>
    %42 = math.tanh %41 : vector<2x128xf32>
    %43 = arith.subf %11, %42 : vector<2x128xf32>
    %44 = arith.mulf %35, %43 : vector<2x128xf32>
    %45 = arith.addf %42, %44 : vector<2x128xf32>
    %46 = vector.extract_strided_slice %45 {offsets = [0, 0], sizes = [2, 8], strides = [1, 1]} : vector<2x128xf32> to vector<2x8xf32>
    %47 = vector.extract_strided_slice %8 {offsets = [2, 0], sizes = [2, 384], strides = [1, 1]} : vector<16x384xf32> to vector<2x384xf32>
    %48 = vector.extract_strided_slice %45 {offsets = [0, 0], sizes = [2, 8], strides = [1, 1]} : vector<2x128xf32> to vector<2x8xf32>
    %49 = arith.truncf %48 : vector<2x8xf32> to vector<2x8xbf16>
    %cst_19 = arith.constant dense<0.000000e+00> : vector<2x384xf32>
    %50 = tpu.matmul %49, %0, %cst_19 {dimension_numbers = #tpu.dot_dimension_numbers<[1], [0], [0], [1], [0, 0, 1, 1], [], []>} : vector<2x8xbf16>, vector<8x384xbf16>, vector<2x384xf32> -> vector<2x384xf32>
    %51 = vector.extract_strided_slice %47 {offsets = [0, 0], sizes = [2, 128], strides = [1, 1]} : vector<2x384xf32> to vector<2x128xf32>
    %52 = vector.extract_strided_slice %50 {offsets = [0, 0], sizes = [2, 128], strides = [1, 1]} : vector<2x384xf32> to vector<2x128xf32>
    %53 = arith.addf %51, %52 : vector<2x128xf32>
    %cst_20 = arith.constant 5.000000e-01 : f32
    %54 = vector.broadcast %cst_20 : f32 to vector<2x128xf32>
    %55 = arith.mulf %54, %53 : vector<2x128xf32>
    %56 = math.tanh %55 : vector<2x128xf32>
    %cst_21 = arith.constant 1.000000e+00 : f32
    %57 = vector.broadcast %cst_21 : f32 to vector<2x128xf32>
    %58 = arith.addf %56, %57 : vector<2x128xf32>
    %cst_22 = arith.constant 5.000000e-01 : f32
    %59 = vector.broadcast %cst_22 : f32 to vector<2x128xf32>
    %60 = arith.mulf %59, %58 : vector<2x128xf32>
    %61 = vector.extract_strided_slice %47 {offsets = [0, 128], sizes = [2, 128], strides = [1, 1]} : vector<2x384xf32> to vector<2x128xf32>
    %62 = vector.extract_strided_slice %50 {offsets = [0, 128], sizes = [2, 128], strides = [1, 1]} : vector<2x384xf32> to vector<2x128xf32>
    %63 = arith.addf %61, %62 : vector<2x128xf32>
    %cst_23 = arith.constant 5.000000e-01 : f32
    %64 = vector.broadcast %cst_23 : f32 to vector<2x128xf32>
    %65 = arith.mulf %64, %63 : vector<2x128xf32>
    %66 = math.tanh %65 : vector<2x128xf32>
    %cst_24 = arith.constant 1.000000e+00 : f32
    %67 = vector.broadcast %cst_24 : f32 to vector<2x128xf32>
    %68 = arith.addf %66, %67 : vector<2x128xf32>
    %cst_25 = arith.constant 5.000000e-01 : f32
    %69 = vector.broadcast %cst_25 : f32 to vector<2x128xf32>
    %70 = arith.mulf %69, %68 : vector<2x128xf32>
    %71 = vector.extract_strided_slice %47 {offsets = [0, 256], sizes = [2, 128], strides = [1, 1]} : vector<2x384xf32> to vector<2x128xf32>
    %72 = vector.extract_strided_slice %50 {offsets = [0, 256], sizes = [2, 128], strides = [1, 1]} : vector<2x384xf32> to vector<2x128xf32>
    %73 = vector.broadcast %1 : vector<1x128xf32> to vector<2x128xf32>
    %74 = arith.addf %72, %73 : vector<2x128xf32>
    %75 = arith.mulf %60, %74 : vector<2x128xf32>
    %76 = arith.addf %71, %75 : vector<2x128xf32>
    %77 = math.tanh %76 : vector<2x128xf32>
    %78 = arith.subf %45, %77 : vector<2x128xf32>
    %79 = arith.mulf %70, %78 : vector<2x128xf32>
    %80 = arith.addf %77, %79 : vector<2x128xf32>
    %81 = vector.extract_strided_slice %80 {offsets = [0, 0], sizes = [2, 8], strides = [1, 1]} : vector<2x128xf32> to vector<2x8xf32>
    %82 = vector.extract_strided_slice %8 {offsets = [4, 0], sizes = [2, 384], strides = [1, 1]} : vector<16x384xf32> to vector<2x384xf32>
    %83 = vector.extract_strided_slice %80 {offsets = [0, 0], sizes = [2, 8], strides = [1, 1]} : vector<2x128xf32> to vector<2x8xf32>
    %84 = arith.truncf %83 : vector<2x8xf32> to vector<2x8xbf16>
    %cst_26 = arith.constant dense<0.000000e+00> : vector<2x384xf32>
    %85 = tpu.matmul %84, %0, %cst_26 {dimension_numbers = #tpu.dot_dimension_numbers<[1], [0], [0], [1], [0, 0, 1, 1], [], []>} : vector<2x8xbf16>, vector<8x384xbf16>, vector<2x384xf32> -> vector<2x384xf32>
    %86 = vector.extract_strided_slice %82 {offsets = [0, 0], sizes = [2, 128], strides = [1, 1]} : vector<2x384xf32> to vector<2x128xf32>
    %87 = vector.extract_strided_slice %85 {offsets = [0, 0], sizes = [2, 128], strides = [1, 1]} : vector<2x384xf32> to vector<2x128xf32>
    %88 = arith.addf %86, %87 : vector<2x128xf32>
    %cst_27 = arith.constant 5.000000e-01 : f32
    %89 = vector.broadcast %cst_27 : f32 to vector<2x128xf32>
    %90 = arith.mulf %89, %88 : vector<2x128xf32>
    %91 = math.tanh %90 : vector<2x128xf32>
    %cst_28 = arith.constant 1.000000e+00 : f32
    %92 = vector.broadcast %cst_28 : f32 to vector<2x128xf32>
    %93 = arith.addf %91, %92 : vector<2x128xf32>
    %cst_29 = arith.constant 5.000000e-01 : f32
    %94 = vector.broadcast %cst_29 : f32 to vector<2x128xf32>
    %95 = arith.mulf %94, %93 : vector<2x128xf32>
    %96 = vector.extract_strided_slice %82 {offsets = [0, 128], sizes = [2, 128], strides = [1, 1]} : vector<2x384xf32> to vector<2x128xf32>
    %97 = vector.extract_strided_slice %85 {offsets = [0, 128], sizes = [2, 128], strides = [1, 1]} : vector<2x384xf32> to vector<2x128xf32>
    %98 = arith.addf %96, %97 : vector<2x128xf32>
    %cst_30 = arith.constant 5.000000e-01 : f32
    %99 = vector.broadcast %cst_30 : f32 to vector<2x128xf32>
    %100 = arith.mulf %99, %98 : vector<2x128xf32>
    %101 = math.tanh %100 : vector<2x128xf32>
    %cst_31 = arith.constant 1.000000e+00 : f32
    %102 = vector.broadcast %cst_31 : f32 to vector<2x128xf32>
    %103 = arith.addf %101, %102 : vector<2x128xf32>
    %cst_32 = arith.constant 5.000000e-01 : f32
    %104 = vector.broadcast %cst_32 : f32 to vector<2x128xf32>
    %105 = arith.mulf %104, %103 : vector<2x128xf32>
    %106 = vector.extract_strided_slice %82 {offsets = [0, 256], sizes = [2, 128], strides = [1, 1]} : vector<2x384xf32> to vector<2x128xf32>
    %107 = vector.extract_strided_slice %85 {offsets = [0, 256], sizes = [2, 128], strides = [1, 1]} : vector<2x384xf32> to vector<2x128xf32>
    %108 = vector.broadcast %1 : vector<1x128xf32> to vector<2x128xf32>
    %109 = arith.addf %107, %108 : vector<2x128xf32>
    %110 = arith.mulf %95, %109 : vector<2x128xf32>
    %111 = arith.addf %106, %110 : vector<2x128xf32>
    %112 = math.tanh %111 : vector<2x128xf32>
    %113 = arith.subf %80, %112 : vector<2x128xf32>
    %114 = arith.mulf %105, %113 : vector<2x128xf32>
    %115 = arith.addf %112, %114 : vector<2x128xf32>
    %116 = vector.extract_strided_slice %115 {offsets = [0, 0], sizes = [2, 8], strides = [1, 1]} : vector<2x128xf32> to vector<2x8xf32>
    %117 = vector.extract_strided_slice %8 {offsets = [6, 0], sizes = [2, 384], strides = [1, 1]} : vector<16x384xf32> to vector<2x384xf32>
    %118 = vector.extract_strided_slice %115 {offsets = [0, 0], sizes = [2, 8], strides = [1, 1]} : vector<2x128xf32> to vector<2x8xf32>
    %119 = arith.truncf %118 : vector<2x8xf32> to vector<2x8xbf16>
    %cst_33 = arith.constant dense<0.000000e+00> : vector<2x384xf32>
    %120 = tpu.matmul %119, %0, %cst_33 {dimension_numbers = #tpu.dot_dimension_numbers<[1], [0], [0], [1], [0, 0, 1, 1], [], []>} : vector<2x8xbf16>, vector<8x384xbf16>, vector<2x384xf32> -> vector<2x384xf32>
    %121 = vector.extract_strided_slice %117 {offsets = [0, 0], sizes = [2, 128], strides = [1, 1]} : vector<2x384xf32> to vector<2x128xf32>
    %122 = vector.extract_strided_slice %120 {offsets = [0, 0], sizes = [2, 128], strides = [1, 1]} : vector<2x384xf32> to vector<2x128xf32>
    %123 = arith.addf %121, %122 : vector<2x128xf32>
    %cst_34 = arith.constant 5.000000e-01 : f32
    %124 = vector.broadcast %cst_34 : f32 to vector<2x128xf32>
    %125 = arith.mulf %124, %123 : vector<2x128xf32>
    %126 = math.tanh %125 : vector<2x128xf32>
    %cst_35 = arith.constant 1.000000e+00 : f32
    %127 = vector.broadcast %cst_35 : f32 to vector<2x128xf32>
    %128 = arith.addf %126, %127 : vector<2x128xf32>
    %cst_36 = arith.constant 5.000000e-01 : f32
    %129 = vector.broadcast %cst_36 : f32 to vector<2x128xf32>
    %130 = arith.mulf %129, %128 : vector<2x128xf32>
    %131 = vector.extract_strided_slice %117 {offsets = [0, 128], sizes = [2, 128], strides = [1, 1]} : vector<2x384xf32> to vector<2x128xf32>
    %132 = vector.extract_strided_slice %120 {offsets = [0, 128], sizes = [2, 128], strides = [1, 1]} : vector<2x384xf32> to vector<2x128xf32>
    %133 = arith.addf %131, %132 : vector<2x128xf32>
    %cst_37 = arith.constant 5.000000e-01 : f32
    %134 = vector.broadcast %cst_37 : f32 to vector<2x128xf32>
    %135 = arith.mulf %134, %133 : vector<2x128xf32>
    %136 = math.tanh %135 : vector<2x128xf32>
    %cst_38 = arith.constant 1.000000e+00 : f32
    %137 = vector.broadcast %cst_38 : f32 to vector<2x128xf32>
    %138 = arith.addf %136, %137 : vector<2x128xf32>
    %cst_39 = arith.constant 5.000000e-01 : f32
    %139 = vector.broadcast %cst_39 : f32 to vector<2x128xf32>
    %140 = arith.mulf %139, %138 : vector<2x128xf32>
    %141 = vector.extract_strided_slice %117 {offsets = [0, 256], sizes = [2, 128], strides = [1, 1]} : vector<2x384xf32> to vector<2x128xf32>
    %142 = vector.extract_strided_slice %120 {offsets = [0, 256], sizes = [2, 128], strides = [1, 1]} : vector<2x384xf32> to vector<2x128xf32>
    %143 = vector.broadcast %1 : vector<1x128xf32> to vector<2x128xf32>
    %144 = arith.addf %142, %143 : vector<2x128xf32>
    %145 = arith.mulf %130, %144 : vector<2x128xf32>
    %146 = arith.addf %141, %145 : vector<2x128xf32>
    %147 = math.tanh %146 : vector<2x128xf32>
    %148 = arith.subf %115, %147 : vector<2x128xf32>
    %149 = arith.mulf %140, %148 : vector<2x128xf32>
    %150 = arith.addf %147, %149 : vector<2x128xf32>
    %151 = vector.extract_strided_slice %150 {offsets = [0, 0], sizes = [2, 8], strides = [1, 1]} : vector<2x128xf32> to vector<2x8xf32>
    %152 = vector.extract_strided_slice %8 {offsets = [8, 0], sizes = [2, 384], strides = [1, 1]} : vector<16x384xf32> to vector<2x384xf32>
    %153 = vector.extract_strided_slice %150 {offsets = [0, 0], sizes = [2, 8], strides = [1, 1]} : vector<2x128xf32> to vector<2x8xf32>
    %154 = arith.truncf %153 : vector<2x8xf32> to vector<2x8xbf16>
    %cst_40 = arith.constant dense<0.000000e+00> : vector<2x384xf32>
    %155 = tpu.matmul %154, %0, %cst_40 {dimension_numbers = #tpu.dot_dimension_numbers<[1], [0], [0], [1], [0, 0, 1, 1], [], []>} : vector<2x8xbf16>, vector<8x384xbf16>, vector<2x384xf32> -> vector<2x384xf32>
    %156 = vector.extract_strided_slice %152 {offsets = [0, 0], sizes = [2, 128], strides = [1, 1]} : vector<2x384xf32> to vector<2x128xf32>
    %157 = vector.extract_strided_slice %155 {offsets = [0, 0], sizes = [2, 128], strides = [1, 1]} : vector<2x384xf32> to vector<2x128xf32>
    %158 = arith.addf %156, %157 : vector<2x128xf32>
    %cst_41 = arith.constant 5.000000e-01 : f32
    %159 = vector.broadcast %cst_41 : f32 to vector<2x128xf32>
    %160 = arith.mulf %159, %158 : vector<2x128xf32>
    %161 = math.tanh %160 : vector<2x128xf32>
    %cst_42 = arith.constant 1.000000e+00 : f32
    %162 = vector.broadcast %cst_42 : f32 to vector<2x128xf32>
    %163 = arith.addf %161, %162 : vector<2x128xf32>
    %cst_43 = arith.constant 5.000000e-01 : f32
    %164 = vector.broadcast %cst_43 : f32 to vector<2x128xf32>
    %165 = arith.mulf %164, %163 : vector<2x128xf32>
    %166 = vector.extract_strided_slice %152 {offsets = [0, 128], sizes = [2, 128], strides = [1, 1]} : vector<2x384xf32> to vector<2x128xf32>
    %167 = vector.extract_strided_slice %155 {offsets = [0, 128], sizes = [2, 128], strides = [1, 1]} : vector<2x384xf32> to vector<2x128xf32>
    %168 = arith.addf %166, %167 : vector<2x128xf32>
    %cst_44 = arith.constant 5.000000e-01 : f32
    %169 = vector.broadcast %cst_44 : f32 to vector<2x128xf32>
    %170 = arith.mulf %169, %168 : vector<2x128xf32>
    %171 = math.tanh %170 : vector<2x128xf32>
    %cst_45 = arith.constant 1.000000e+00 : f32
    %172 = vector.broadcast %cst_45 : f32 to vector<2x128xf32>
    %173 = arith.addf %171, %172 : vector<2x128xf32>
    %cst_46 = arith.constant 5.000000e-01 : f32
    %174 = vector.broadcast %cst_46 : f32 to vector<2x128xf32>
    %175 = arith.mulf %174, %173 : vector<2x128xf32>
    %176 = vector.extract_strided_slice %152 {offsets = [0, 256], sizes = [2, 128], strides = [1, 1]} : vector<2x384xf32> to vector<2x128xf32>
    %177 = vector.extract_strided_slice %155 {offsets = [0, 256], sizes = [2, 128], strides = [1, 1]} : vector<2x384xf32> to vector<2x128xf32>
    %178 = vector.broadcast %1 : vector<1x128xf32> to vector<2x128xf32>
    %179 = arith.addf %177, %178 : vector<2x128xf32>
    %180 = arith.mulf %165, %179 : vector<2x128xf32>
    %181 = arith.addf %176, %180 : vector<2x128xf32>
    %182 = math.tanh %181 : vector<2x128xf32>
    %183 = arith.subf %150, %182 : vector<2x128xf32>
    %184 = arith.mulf %175, %183 : vector<2x128xf32>
    %185 = arith.addf %182, %184 : vector<2x128xf32>
    %186 = vector.extract_strided_slice %185 {offsets = [0, 0], sizes = [2, 8], strides = [1, 1]} : vector<2x128xf32> to vector<2x8xf32>
    %187 = vector.extract_strided_slice %8 {offsets = [10, 0], sizes = [2, 384], strides = [1, 1]} : vector<16x384xf32> to vector<2x384xf32>
    %188 = vector.extract_strided_slice %185 {offsets = [0, 0], sizes = [2, 8], strides = [1, 1]} : vector<2x128xf32> to vector<2x8xf32>
    %189 = arith.truncf %188 : vector<2x8xf32> to vector<2x8xbf16>
    %cst_47 = arith.constant dense<0.000000e+00> : vector<2x384xf32>
    %190 = tpu.matmul %189, %0, %cst_47 {dimension_numbers = #tpu.dot_dimension_numbers<[1], [0], [0], [1], [0, 0, 1, 1], [], []>} : vector<2x8xbf16>, vector<8x384xbf16>, vector<2x384xf32> -> vector<2x384xf32>
    %191 = vector.extract_strided_slice %187 {offsets = [0, 0], sizes = [2, 128], strides = [1, 1]} : vector<2x384xf32> to vector<2x128xf32>
    %192 = vector.extract_strided_slice %190 {offsets = [0, 0], sizes = [2, 128], strides = [1, 1]} : vector<2x384xf32> to vector<2x128xf32>
    %193 = arith.addf %191, %192 : vector<2x128xf32>
    %cst_48 = arith.constant 5.000000e-01 : f32
    %194 = vector.broadcast %cst_48 : f32 to vector<2x128xf32>
    %195 = arith.mulf %194, %193 : vector<2x128xf32>
    %196 = math.tanh %195 : vector<2x128xf32>
    %cst_49 = arith.constant 1.000000e+00 : f32
    %197 = vector.broadcast %cst_49 : f32 to vector<2x128xf32>
    %198 = arith.addf %196, %197 : vector<2x128xf32>
    %cst_50 = arith.constant 5.000000e-01 : f32
    %199 = vector.broadcast %cst_50 : f32 to vector<2x128xf32>
    %200 = arith.mulf %199, %198 : vector<2x128xf32>
    %201 = vector.extract_strided_slice %187 {offsets = [0, 128], sizes = [2, 128], strides = [1, 1]} : vector<2x384xf32> to vector<2x128xf32>
    %202 = vector.extract_strided_slice %190 {offsets = [0, 128], sizes = [2, 128], strides = [1, 1]} : vector<2x384xf32> to vector<2x128xf32>
    %203 = arith.addf %201, %202 : vector<2x128xf32>
    %cst_51 = arith.constant 5.000000e-01 : f32
    %204 = vector.broadcast %cst_51 : f32 to vector<2x128xf32>
    %205 = arith.mulf %204, %203 : vector<2x128xf32>
    %206 = math.tanh %205 : vector<2x128xf32>
    %cst_52 = arith.constant 1.000000e+00 : f32
    %207 = vector.broadcast %cst_52 : f32 to vector<2x128xf32>
    %208 = arith.addf %206, %207 : vector<2x128xf32>
    %cst_53 = arith.constant 5.000000e-01 : f32
    %209 = vector.broadcast %cst_53 : f32 to vector<2x128xf32>
    %210 = arith.mulf %209, %208 : vector<2x128xf32>
    %211 = vector.extract_strided_slice %187 {offsets = [0, 256], sizes = [2, 128], strides = [1, 1]} : vector<2x384xf32> to vector<2x128xf32>
    %212 = vector.extract_strided_slice %190 {offsets = [0, 256], sizes = [2, 128], strides = [1, 1]} : vector<2x384xf32> to vector<2x128xf32>
    %213 = vector.broadcast %1 : vector<1x128xf32> to vector<2x128xf32>
    %214 = arith.addf %212, %213 : vector<2x128xf32>
    %215 = arith.mulf %200, %214 : vector<2x128xf32>
    %216 = arith.addf %211, %215 : vector<2x128xf32>
    %217 = math.tanh %216 : vector<2x128xf32>
    %218 = arith.subf %185, %217 : vector<2x128xf32>
    %219 = arith.mulf %210, %218 : vector<2x128xf32>
    %220 = arith.addf %217, %219 : vector<2x128xf32>
    %221 = vector.extract_strided_slice %220 {offsets = [0, 0], sizes = [2, 8], strides = [1, 1]} : vector<2x128xf32> to vector<2x8xf32>
    %222 = vector.extract_strided_slice %8 {offsets = [12, 0], sizes = [2, 384], strides = [1, 1]} : vector<16x384xf32> to vector<2x384xf32>
    %223 = vector.extract_strided_slice %220 {offsets = [0, 0], sizes = [2, 8], strides = [1, 1]} : vector<2x128xf32> to vector<2x8xf32>
    %224 = arith.truncf %223 : vector<2x8xf32> to vector<2x8xbf16>
    %cst_54 = arith.constant dense<0.000000e+00> : vector<2x384xf32>
    %225 = tpu.matmul %224, %0, %cst_54 {dimension_numbers = #tpu.dot_dimension_numbers<[1], [0], [0], [1], [0, 0, 1, 1], [], []>} : vector<2x8xbf16>, vector<8x384xbf16>, vector<2x384xf32> -> vector<2x384xf32>
    %226 = vector.extract_strided_slice %222 {offsets = [0, 0], sizes = [2, 128], strides = [1, 1]} : vector<2x384xf32> to vector<2x128xf32>
    %227 = vector.extract_strided_slice %225 {offsets = [0, 0], sizes = [2, 128], strides = [1, 1]} : vector<2x384xf32> to vector<2x128xf32>
    %228 = arith.addf %226, %227 : vector<2x128xf32>
    %cst_55 = arith.constant 5.000000e-01 : f32
    %229 = vector.broadcast %cst_55 : f32 to vector<2x128xf32>
    %230 = arith.mulf %229, %228 : vector<2x128xf32>
    %231 = math.tanh %230 : vector<2x128xf32>
    %cst_56 = arith.constant 1.000000e+00 : f32
    %232 = vector.broadcast %cst_56 : f32 to vector<2x128xf32>
    %233 = arith.addf %231, %232 : vector<2x128xf32>
    %cst_57 = arith.constant 5.000000e-01 : f32
    %234 = vector.broadcast %cst_57 : f32 to vector<2x128xf32>
    %235 = arith.mulf %234, %233 : vector<2x128xf32>
    %236 = vector.extract_strided_slice %222 {offsets = [0, 128], sizes = [2, 128], strides = [1, 1]} : vector<2x384xf32> to vector<2x128xf32>
    %237 = vector.extract_strided_slice %225 {offsets = [0, 128], sizes = [2, 128], strides = [1, 1]} : vector<2x384xf32> to vector<2x128xf32>
    %238 = arith.addf %236, %237 : vector<2x128xf32>
    %cst_58 = arith.constant 5.000000e-01 : f32
    %239 = vector.broadcast %cst_58 : f32 to vector<2x128xf32>
    %240 = arith.mulf %239, %238 : vector<2x128xf32>
    %241 = math.tanh %240 : vector<2x128xf32>
    %cst_59 = arith.constant 1.000000e+00 : f32
    %242 = vector.broadcast %cst_59 : f32 to vector<2x128xf32>
    %243 = arith.addf %241, %242 : vector<2x128xf32>
    %cst_60 = arith.constant 5.000000e-01 : f32
    %244 = vector.broadcast %cst_60 : f32 to vector<2x128xf32>
    %245 = arith.mulf %244, %243 : vector<2x128xf32>
    %246 = vector.extract_strided_slice %222 {offsets = [0, 256], sizes = [2, 128], strides = [1, 1]} : vector<2x384xf32> to vector<2x128xf32>
    %247 = vector.extract_strided_slice %225 {offsets = [0, 256], sizes = [2, 128], strides = [1, 1]} : vector<2x384xf32> to vector<2x128xf32>
    %248 = vector.broadcast %1 : vector<1x128xf32> to vector<2x128xf32>
    %249 = arith.addf %247, %248 : vector<2x128xf32>
    %250 = arith.mulf %235, %249 : vector<2x128xf32>
    %251 = arith.addf %246, %250 : vector<2x128xf32>
    %252 = math.tanh %251 : vector<2x128xf32>
    %253 = arith.subf %220, %252 : vector<2x128xf32>
    %254 = arith.mulf %245, %253 : vector<2x128xf32>
    %255 = arith.addf %252, %254 : vector<2x128xf32>
    %256 = vector.extract_strided_slice %255 {offsets = [0, 0], sizes = [2, 8], strides = [1, 1]} : vector<2x128xf32> to vector<2x8xf32>
    %257 = vector.extract_strided_slice %8 {offsets = [14, 0], sizes = [2, 384], strides = [1, 1]} : vector<16x384xf32> to vector<2x384xf32>
    %258 = vector.extract_strided_slice %255 {offsets = [0, 0], sizes = [2, 8], strides = [1, 1]} : vector<2x128xf32> to vector<2x8xf32>
    %259 = arith.truncf %258 : vector<2x8xf32> to vector<2x8xbf16>
    %cst_61 = arith.constant dense<0.000000e+00> : vector<2x384xf32>
    %260 = tpu.matmul %259, %0, %cst_61 {dimension_numbers = #tpu.dot_dimension_numbers<[1], [0], [0], [1], [0, 0, 1, 1], [], []>} : vector<2x8xbf16>, vector<8x384xbf16>, vector<2x384xf32> -> vector<2x384xf32>
    %261 = vector.extract_strided_slice %257 {offsets = [0, 0], sizes = [2, 128], strides = [1, 1]} : vector<2x384xf32> to vector<2x128xf32>
    %262 = vector.extract_strided_slice %260 {offsets = [0, 0], sizes = [2, 128], strides = [1, 1]} : vector<2x384xf32> to vector<2x128xf32>
    %263 = arith.addf %261, %262 : vector<2x128xf32>
    %cst_62 = arith.constant 5.000000e-01 : f32
    %264 = vector.broadcast %cst_62 : f32 to vector<2x128xf32>
    %265 = arith.mulf %264, %263 : vector<2x128xf32>
    %266 = math.tanh %265 : vector<2x128xf32>
    %cst_63 = arith.constant 1.000000e+00 : f32
    %267 = vector.broadcast %cst_63 : f32 to vector<2x128xf32>
    %268 = arith.addf %266, %267 : vector<2x128xf32>
    %cst_64 = arith.constant 5.000000e-01 : f32
    %269 = vector.broadcast %cst_64 : f32 to vector<2x128xf32>
    %270 = arith.mulf %269, %268 : vector<2x128xf32>
    %271 = vector.extract_strided_slice %257 {offsets = [0, 128], sizes = [2, 128], strides = [1, 1]} : vector<2x384xf32> to vector<2x128xf32>
    %272 = vector.extract_strided_slice %260 {offsets = [0, 128], sizes = [2, 128], strides = [1, 1]} : vector<2x384xf32> to vector<2x128xf32>
    %273 = arith.addf %271, %272 : vector<2x128xf32>
    %cst_65 = arith.constant 5.000000e-01 : f32
    %274 = vector.broadcast %cst_65 : f32 to vector<2x128xf32>
    %275 = arith.mulf %274, %273 : vector<2x128xf32>
    %276 = math.tanh %275 : vector<2x128xf32>
    %cst_66 = arith.constant 1.000000e+00 : f32
    %277 = vector.broadcast %cst_66 : f32 to vector<2x128xf32>
    %278 = arith.addf %276, %277 : vector<2x128xf32>
    %cst_67 = arith.constant 5.000000e-01 : f32
    %279 = vector.broadcast %cst_67 : f32 to vector<2x128xf32>
    %280 = arith.mulf %279, %278 : vector<2x128xf32>
    %281 = vector.extract_strided_slice %257 {offsets = [0, 256], sizes = [2, 128], strides = [1, 1]} : vector<2x384xf32> to vector<2x128xf32>
    %282 = vector.extract_strided_slice %260 {offsets = [0, 256], sizes = [2, 128], strides = [1, 1]} : vector<2x384xf32> to vector<2x128xf32>
    %283 = vector.broadcast %1 : vector<1x128xf32> to vector<2x128xf32>
    %284 = arith.addf %282, %283 : vector<2x128xf32>
    %285 = arith.mulf %270, %284 : vector<2x128xf32>
    %286 = arith.addf %281, %285 : vector<2x128xf32>
    %287 = math.tanh %286 : vector<2x128xf32>
    %288 = arith.subf %255, %287 : vector<2x128xf32>
    %289 = arith.mulf %280, %288 : vector<2x128xf32>
    %290 = arith.addf %287, %289 : vector<2x128xf32>
    %291 = vector.extract_strided_slice %290 {offsets = [0, 0], sizes = [2, 8], strides = [1, 1]} : vector<2x128xf32> to vector<2x8xf32>
    %292 = tpu.concatenate %46, %81, %116, %151, %186, %221, %256, %291 in 0 : vector<2x8xf32>, vector<2x8xf32>, vector<2x8xf32>, vector<2x8xf32>, vector<2x8xf32>, vector<2x8xf32>, vector<2x8xf32>, vector<2x8xf32> -> vector<16x8xf32>
    %c0_68 = arith.constant 0 : index
    %c0_69 = arith.constant 0 : index
    %293 = vector.load %arg6[%c0_68, %c0_69] : memref<8x128xf32, #tpu.memory_space<vmem>>, vector<8x128xf32>
    %cst_70 = arith.constant dense<0.000000e+00> : vector<16x128xf32>
    %294 = tpu.matmul %292, %293, %cst_70 {dimension_numbers = #tpu.dot_dimension_numbers<[1], [0], [0], [1], [0, 0, 1, 1], [], []>} : vector<16x8xf32>, vector<8x128xf32>, vector<16x128xf32> -> vector<16x128xf32>
    %c0_71 = arith.constant 0 : index
    %c0_72 = arith.constant 0 : index
    %295 = vector.load %arg7[%c0_71, %c0_72] : memref<1x128xf32, #tpu.memory_space<vmem>>, vector<1x128xf32>
    %296 = vector.broadcast %295 : vector<1x128xf32> to vector<16x128xf32>
    %297 = arith.addf %294, %296 : vector<16x128xf32>
    %c0_73 = arith.constant 0 : index
    %c0_74 = arith.constant 0 : index
    %298 = vector.load %arg8[%c0_73, %c0_74] : memref<16x128xf32, #tpu.memory_space<vmem>>, vector<16x128xf32>
    tpu.vector_store %arg8[%c0_73, %c0_74], %297 {strides = array<i32>} : memref<16x128xf32, #tpu.memory_space<vmem>>, vector<16x128xf32>,
    %c0_75 = arith.constant 0 : index
    %c0_76 = arith.constant 0 : index
    %299 = vector.load %arg9[%c0_75, %c0_76] : memref<2x128xf32, #tpu.memory_space<vmem>>, vector<2x128xf32>
    tpu.vector_store %arg9[%c0_75, %c0_76], %290 {strides = array<i32>} : memref<2x128xf32, #tpu.memory_space<vmem>>, vector<2x128xf32>,
    return
  }
}

</mosaic_0001>

<llo_original>
// kernel: environment_model_forward.1
$region0: #{environment_model_forward.1}
  #allocation0 [shape = 'u32[]', space=smem, size = 0x4, offset = 0x4, fixed_abs, tag = 'smem constant byte address 0x4 - core index']
  #allocation1 [shape = 'u32[144,128]{1,0:T(1,128)}', space=vmem, size = 0x12000, scoped, tag = 'internal scratch']
  %s0 = inlined_call_operand.vmem [shape: f32[8,2,5], index: 0, kind: input, shape index: {}]
  %s1 = inlined_call_operand.vmem [shape: f32[1,128], index: 1, kind: input, shape index: {}]
  %s2 = inlined_call_operand.vmem [shape: f32[5,384], index: 2, kind: input, shape index: {}]
  %s3 = inlined_call_operand.vmem [shape: bf16[8,384], index: 3, kind: input, shape index: {}]
  %s4 = inlined_call_operand.vmem [shape: f32[1,384], index: 4, kind: input, shape index: {}]
  %s5 = inlined_call_operand.hbm [shape: f32[1,128], index: 5, kind: input, shape index: {}]
  %s6 = inlined_call_operand.hbm [shape: f32[8,128], index: 6, kind: input, shape index: {}]
  %s7 = inlined_call_operand.hbm [shape: f32[1,128], index: 7, kind: input, shape index: {}]
  %s8 = inlined_call_operand.vmem [shape: f32[16,128], index: 8, kind: output, shape index: {0}]
  %s9 = inlined_call_operand.vmem [shape: f32[2,128], index: 9, kind: output, shape index: {1}]
  %10 = xla_tuple %s8, %s9
  %s11 = sld [smem:[#allocation0]]
  $region62: #{environment_model_forward.1} parent=0
    _
  %s13 = ssub.s32 1, %s11
  %s14 = scalar_select 0, %s13, %s11
  $region1: #{environment_model_forward.1} parent=0
    #allocation2 [shape = 'u8[512]{0}', space=vmem, size = 0x400, scoped, tag = 'input window, operand 5, single buffered']
    #allocation3 [shape = 's32[1]{0}', space=sflag, size = 0x4, scoped, tag = 'scoped memory for environment_model_forward.1']
    #allocation4 [shape = 'u8[4096]{0}', space=vmem, size = 0x1000, scoped, tag = 'input window, operand 6, single buffered']
    #allocation5 [shape = 's32[1]{0}', space=sflag, size = 0x4, scoped, tag = 'scoped memory for environment_model_forward.1']
    #allocation6 [shape = 'u8[512]{0}', space=vmem, size = 0x400, scoped, tag = 'input window, operand 7, single buffered']
    %15 = vsyncpa [#allocation3], 0
    %16 = vsyncpa [#allocation5], 0
    // Predicated region
    $region2: #{environment_model_forward.1} parent=1 // pred_check
      _
    $region3: #{environment_model_forward.1} parent=1 // pred_check_branch
      %18 = sbr.rel (0) target = $region5
    $region4: #{environment_model_forward.1} parent=1 // pred_region
      _
    $region5: #{environment_model_forward.1} parent=1 // pred_fallthru
      _
    // Predicated region
    $region6: #{environment_model_forward.1} parent=1 // pred_check
      _
    $region7: #{environment_model_forward.1} parent=1 // pred_check_branch
      %20 = sbr.rel (0) target = $region9
    $region8: #{environment_model_forward.1} parent=1 // pred_region
      _
    $region9: #{environment_model_forward.1} parent=1 // pred_fallthru
      _
    // Predicated region
    $region10: #{environment_model_forward.1} parent=1 // pred_check
      _
    $region11: #{environment_model_forward.1} parent=1 // pred_check_branch
      %22 = sbr.rel (0) target = $region13
    $region12: #{environment_model_forward.1} parent=1 // pred_region
      _
    $region13: #{environment_model_forward.1} parent=1 // pred_fallthru
      _
    // Predicated region
    $region14: #{environment_model_forward.1} parent=1 // pred_check
      _
    $region15: #{environment_model_forward.1} parent=1 // pred_check_branch
      %24 = sbr.rel (0) target = $region17
    $region16: #{environment_model_forward.1} parent=1 // pred_region
      _
    $region17: #{environment_model_forward.1} parent=1 // pred_fallthru
      _
    // Predicated region
    $region18: #{environment_model_forward.1} parent=1 // pred_check
      _
    $region19: #{environment_model_forward.1} parent=1 // pred_check_branch
      %26 = sbr.rel (0) target = $region21
    $region20: #{environment_model_forward.1} parent=1 // pred_region
      _
    $region21: #{environment_model_forward.1} parent=1 // pred_fallthru
      _
    // Predicated region
    $region22: #{environment_model_forward.1} parent=1 // pred_check
      _
    $region23: #{environment_model_forward.1} parent=1 // pred_check_branch
      %28 = sbr.rel (0) target = $region25
    $region24: #{environment_model_forward.1} parent=1 // pred_region
      %s30 = ssub.s32 16, 16
      %31 = vsyncadd [#allocation3], %s30
      %s33 = sshll.u32 [#allocation2], 4
      %s34 = int_to_ptr.vmem [resolvable:$true] %s33
      %36 = dma.hbm_to_vmem [thread:$0]  %s5, 16, %s34, [#allocation3]
    $region25: #{environment_model_forward.1} parent=1 // pred_fallthru
      _
    // Predicated region
    $region26: #{environment_model_forward.1} parent=1 // pred_check
      _
    $region27: #{environment_model_forward.1} parent=1 // pred_check_branch
      %38 = sbr.rel (0) target = $region29
    $region28: #{environment_model_forward.1} parent=1 // pred_region
      %s40 = ssub.s32 128, 128
      %41 = vsyncadd [#allocation5], %s40
      %s43 = sshll.u32 [#allocation4], 4
      %s44 = int_to_ptr.vmem [resolvable:$true] %s43
      %46 = dma.hbm_to_vmem [thread:$0]  %s6, 128, %s44, [#allocation5]
    $region29: #{environment_model_forward.1} parent=1 // pred_fallthru
      _
    // Predicated region
    $region30: #{environment_model_forward.1} parent=1 // pred_check
      _
    $region31: #{environment_model_forward.1} parent=1 // pred_check_branch
      %48 = sbr.rel (0) target = $region33
    $region32: #{environment_model_forward.1} parent=1 // pred_region
      %s50 = ssub.s32 16, 16
      %51 = vsyncadd [#allocation5], %s50
      %s53 = sshll.u32 [#allocation6], 4
      %s54 = int_to_ptr.vmem [resolvable:$true] %s53
      %56 = dma.hbm_to_vmem [thread:$0]  %s7, 16, %s54, [#allocation5]
    $region33: #{environment_model_forward.1} parent=1 // pred_fallthru
      _
    // Predicated region
    $region34: #{environment_model_forward.1} parent=1 // pred_check
      _
    $region35: #{environment_model_forward.1} parent=1 // pred_check_branch
      %58 = sbr.rel (0) target = $region37
    $region36: #{environment_model_forward.1} parent=1 // pred_region
      %59 = dma.done [#allocation3], 16
    $region37: #{environment_model_forward.1} parent=1 // pred_fallthru
      _
    // Predicated region
    $region38: #{environment_model_forward.1} parent=1 // pred_check
      _
    $region39: #{environment_model_forward.1} parent=1 // pred_check_branch
      %61 = sbr.rel (0) target = $region41
    $region40: #{environment_model_forward.1} parent=1 // pred_region
      %62 = dma.done [#allocation5], 128
    $region41: #{environment_model_forward.1} parent=1 // pred_fallthru
      _
    // Predicated region
    $region42: #{environment_model_forward.1} parent=1 // pred_check
      _
    $region43: #{environment_model_forward.1} parent=1 // pred_check_branch
      %64 = sbr.rel (0) target = $region45
    $region44: #{environment_model_forward.1} parent=1 // pred_region
      %65 = dma.done [#allocation5], 16
    $region45: #{environment_model_forward.1} parent=1 // pred_fallthru
      _
    %v67 = vld [vmem:[%s3] sm:$0xff]
    %v68 = vld [vmem:[%s3 + $0x8] sm:$0xf]
    %v69 = vld [vmem:[#allocation2] sm:$0x1]
    %v70 = vld [vmem:[%s0] sm:$0x3]
    %v71 = vld [vmem:[%s0 + $0x2] sm:$0x3]
    %v72 = vld [vmem:[%s0 + $0x4] sm:$0x3]
    %v73 = vld [vmem:[%s0 + $0x6] sm:$0x3]
    %v74 = vld [vmem:[%s0 + $0x8] sm:$0x3]
    %v75 = vld [vmem:[%s0 + $0xa] sm:$0x3]
    %v76 = vld [vmem:[%s0 + $0xc] sm:$0x3]
    %v77 = vld [vmem:[%s0 + $0xe] sm:$0x3]
    %v78 = vld [vmem:[%s2] sm:$0x1f]
    %v79 = vld [vmem:[%s2 + $0x8] sm:$0x1f]
    %v80 = vld [vmem:[%s2 + $0x10] sm:$0x1f]
    %v81 = vld [vmem:[%s4] sm:$0x7]
    %v83 = vlaneseq
    %v84 = vshrl.u32 %v83, 7
    %v85 = vsub.s32 0, %v84
    %v86 = vrot.slane %v81, %v85
    %v87 = vlaneseq
    %v88 = vshrl.u32 %v87, 7
    %v89 = vsub.s32 1, %v88
    %v90 = vrot.slane %v81, %v89
    %v91 = vlaneseq
    %v92 = vshrl.u32 %v91, 7
    %v93 = vsub.s32 2, %v92
    %v94 = vrot.slane %v81, %v93
    %v106 = vcombine.low %v70, %v71
    %v107 = vcombine.low %v72, %v73
    %v109 = vunpack.c.l.s4 1983009808
    %v110 = vunpack.c.0.s8 %v109
    %v111 = vlaneseq
    %v112 = vshrl.u32 %v111, 7
    %v113 = vsub.s32 %v110, %v112
    %v114 = vrot.slane %v106, %v113
    %v116 = vunpack.c.l.s4 1983009808
    %v117 = vunpack.c.0.s8 %v116
    %v118 = vlaneseq
    %v119 = vshrl.u32 %v118, 7
    %v120 = vsub.s32 %v117, %v119
    %v121 = vrot.slane %v107, %v120
    %v122 = vcombine.low %v114, %v121
    %v123 = vcombine.low %v74, %v75
    %v124 = vcombine.low %v76, %v77
    %v126 = vunpack.c.l.s4 1983009808
    %v127 = vunpack.c.0.s8 %v126
    %v128 = vlaneseq
    %v129 = vshrl.u32 %v128, 7
    %v130 = vsub.s32 %v127, %v129
    %v131 = vrot.slane %v123, %v130
    %v133 = vunpack.c.l.s4 1983009808
    %v134 = vunpack.c.0.s8 %v133
    %v135 = vlaneseq
    %v136 = vshrl.u32 %v135, 7
    %v137 = vsub.s32 %v134, %v136
    %v138 = vrot.slane %v124, %v137
    %v139 = vcombine.low %v131, %v138
    %vm140 = vcmask 39936
    %v141 = vsel %vm140, %v122, 0
    %v143 = vsel %vm140, %v139, 0
    %vm145 = vcmask 1044480
    %v147 = vsel %vm145, %v78, 0
    %v150 = vsel %vm145, %v79, 0
    %v153 = vsel %vm145, %v80, 0
    %155 = vmatprep.subr.mxu0 0.0
    %156 = vmatpush1.msra.mxu0 0.0
    %157 = vmatprep.subr.mxu0 0.0
    %158 = vmatpush1.msra.mxu0 0.0
    %159 = vmatprep.subr.mxu0 0.0
    %160 = vmatpush1.msra.mxu0 0.0
    %161 = vmatprep.subr.mxu0 0.0
    %162 = vmatpush1.msra.mxu0 0.0
    %163 = vmatprep.subr.mxu0 0.0
    %164 = vmatpush1.msra.mxu0 0.0
    %165 = vmatprep.subr.mxu0 0.0
    %166 = vmatpush1.msra.mxu0 0.0
    %167 = vmatprep.subr.mxu0 0.0
    %168 = vmatpush1.msra.mxu0 0.0
    %169 = vmatprep.subr.mxu0 0.0
    %170 = vmatpush1.msra.mxu0 0.0
    %171 = vmatprep.subr.mxu0 0.0
    %172 = vmatpush1.msra.mxu0 0.0
    %173 = vmatprep.subr.mxu0 0.0
    %174 = vmatpush1.msra.mxu0 0.0
    %175 = vmatprep.subr.mxu0 0.0
    %176 = vmatpush1.msra.mxu0 0.0
    %177 = vmatprep.subr.mxu0 0.0
    %178 = vmatpush1.msra.mxu0 0.0
    %179 = vmatprep.subr.mxu0 0.0
    %180 = vmatpush1.msra.mxu0 0.0
    %181 = vmatprep.subr.mxu0 0.0
    %182 = vmatpush1.msra.mxu0 0.0
    %183 = vmatprep.subr.mxu0 0.0
    %184 = vmatpush1.msra.mxu0 0.0
    %185 = vmatprep.subr.mxu0 %v150
    %186 = vmatpush1.msra.mxu0 %v147
    %187 = vmatprep.subr.mxu0 0.0
    %188 = vmatpush2.msra.mxu0 0.0
    %189 = vmatprep.subr.mxu0 0.0
    %190 = vmatpush2.msra.mxu0 0.0
    %191 = vmatprep.subr.mxu0 0.0
    %192 = vmatpush2.msra.mxu0 0.0
    %193 = vmatprep.subr.mxu0 0.0
    %194 = vmatpush2.msra.mxu0 0.0
    %195 = vmatprep.subr.mxu0 0.0
    %196 = vmatpush2.msra.mxu0 0.0
    %197 = vmatprep.subr.mxu0 0.0
    %198 = vmatpush2.msra.mxu0 0.0
    %199 = vmatprep.subr.mxu0 0.0
    %200 = vmatpush2.msra.mxu0 0.0
    %201 = vmatprep.subr.mxu0 0.0
    %202 = vmatpush2.msra.mxu0 0.0
    %203 = vmatprep.subr.mxu0 0.0
    %204 = vmatpush2.msra.mxu0 0.0
    %205 = vmatprep.subr.mxu0 0.0
    %206 = vmatpush2.msra.mxu0 0.0
    %207 = vmatprep.subr.mxu0 0.0
    %208 = vmatpush2.msra.mxu0 0.0
    %209 = vmatprep.subr.mxu0 0.0
    %210 = vmatpush2.msra.mxu0 0.0
    %211 = vmatprep.subr.mxu0 0.0
    %212 = vmatpush2.msra.mxu0 0.0
    %213 = vmatprep.subr.mxu0 0.0
    %214 = vmatpush2.msra.mxu0 0.0
    %215 = vmatprep.subr.mxu0 0.0
    %216 = vmatpush2.msra.mxu0 0.0
    %217 = vmatprep.subr.mxu0 0.0
    %218 = vmatpush2.msra.mxu0 0.0
    %219 = vmatprep.mubr.f32.mxu0 0.0
    %220 = vmatmul.mubr.f32.gmra.mxu0 %v141
    %v221 = vpop.f32.mrf.mxu0
    %v222 = vadd.f32 %v86, %v221
    %v223 = vpop.f32.mrf.mxu0
    %v224 = vadd.f32 %v90, %v223
    %225 = vmatprep.mubr.f32.mxu0 0.0
    %226 = vmatmul.mubr.f32.gmra.mxu0 %v143
    %v227 = vpop.f32.mrf.mxu0
    %v228 = vadd.f32 %v86, %v227
    %v229 = vpop.f32.mrf.mxu0
    %v230 = vadd.f32 %v90, %v229
    %231 = vdwg.mxu0
    %232 = vmatprep.subr.mxu0 0.0
    %233 = vmatpush1.msra.mxu0 0.0
    %234 = vmatprep.subr.mxu0 0.0
    %235 = vmatpush1.msra.mxu0 0.0
    %236 = vmatprep.subr.mxu0 0.0
    %237 = vmatpush1.msra.mxu0 0.0
    %238 = vmatprep.subr.mxu0 0.0
    %239 = vmatpush1.msra.mxu0 0.0
    %240 = vmatprep.subr.mxu0 0.0
    %241 = vmatpush1.msra.mxu0 0.0
    %242 = vmatprep.subr.mxu0 0.0
    %243 = vmatpush1.msra.mxu0 0.0
    %244 = vmatprep.subr.mxu0 0.0
    %245 = vmatpush1.msra.mxu0 0.0
    %246 = vmatprep.subr.mxu0 0.0
    %247 = vmatpush1.msra.mxu0 0.0
    %248 = vmatprep.subr.mxu0 0.0
    %249 = vmatpush1.msra.mxu0 0.0
    %250 = vmatprep.subr.mxu0 0.0
    %251 = vmatpush1.msra.mxu0 0.0
    %252 = vmatprep.subr.mxu0 0.0
    %253 = vmatpush1.msra.mxu0 0.0
    %254 = vmatprep.subr.mxu0 0.0
    %255 = vmatpush1.msra.mxu0 0.0
    %256 = vmatprep.subr.mxu0 0.0
    %257 = vmatpush1.msra.mxu0 0.0
    %258 = vmatprep.subr.mxu0 0.0
    %259 = vmatpush1.msra.mxu0 0.0
    %260 = vmatprep.subr.mxu0 0.0
    %261 = vmatpush1.msra.mxu0 0.0
    %262 = vmatprep.subr.mxu0 0.0
    %263 = vmatpush1.msra.mxu0 %v153
    %264 = vmatprep.subr.mxu0 0.0
    %265 = vmatpush2.msra.mxu0 0.0
    %266 = vmatprep.subr.mxu0 0.0
    %267 = vmatpush2.msra.mxu0 0.0
    %268 = vmatprep.subr.mxu0 0.0
    %269 = vmatpush2.msra.mxu0 0.0
    %270 = vmatprep.subr.mxu0 0.0
    %271 = vmatpush2.msra.mxu0 0.0
    %272 = vmatprep.subr.mxu0 0.0
    %273 = vmatpush2.msra.mxu0 0.0
    %274 = vmatprep.subr.mxu0 0.0
    %275 = vmatpush2.msra.mxu0 0.0
    %276 = vmatprep.subr.mxu0 0.0
    %277 = vmatpush2.msra.mxu0 0.0
    %278 = vmatprep.subr.mxu0 0.0
    %279 = vmatpush2.msra.mxu0 0.0
    %280 = vmatprep.subr.mxu0 0.0
    %281 = vmatpush2.msra.mxu0 0.0
    %282 = vmatprep.subr.mxu0 0.0
    %283 = vmatpush2.msra.mxu0 0.0
    %284 = vmatprep.subr.mxu0 0.0
    %285 = vmatpush2.msra.mxu0 0.0
    %286 = vmatprep.subr.mxu0 0.0
    %287 = vmatpush2.msra.mxu0 0.0
    %288 = vmatprep.subr.mxu0 0.0
    %289 = vmatpush2.msra.mxu0 0.0
    %290 = vmatprep.subr.mxu0 0.0
    %291 = vmatpush2.msra.mxu0 0.0
    %292 = vmatprep.subr.mxu0 0.0
    %293 = vmatpush2.msra.mxu0 0.0
    %294 = vmatprep.subr.mxu0 0.0
    %295 = vmatpush2.msra.mxu0 0.0
    %296 = vmatprep.mubr.f32.mxu0 0.0
    %297 = vmatmul.mubr.f32.gmra.mxu0 %v141
    %v298 = vpop.f32.mrf.mxu0
    %v299 = vadd.f32 %v94, %v298
    %v300 = vpop.f32.mrf.mxu0
    %301 = vmatprep.mubr.f32.mxu0 0.0
    %302 = vmatmul.mubr.f32.gmra.mxu0 %v143
    %v303 = vpop.f32.mrf.mxu0
    %v304 = vadd.f32 %v94, %v303
    %v305 = vpop.f32.mrf.mxu0
    %306 = vdwg.mxu0
    %v307 = vld [vmem:[%s1] sm:$0x1]
    %v309 = vlaneseq
    %v310 = vshrl.u32 %v309, 7
    %v311 = vsub.s32 0, %v310
    %v312 = vrot.slane %v307, %v311
    %v314 = vpack.c.bf16 %v312, %v312
    %v317 = vunpack.c.l.b16 %v67
    %v318 = vunpack.c.h.b16 %v67
    %v319 = vunpack.c.l.b16 %v68
    %v320 = vpack.c.b16 %v317, %v317
    %v321 = vpack.c.b16 %v318, %v318
    %v322 = vpack.c.b16 %v319, %v319
    %vm323 = vcmask 64512
    %v325 = vsel %vm323, %v314, 0
    %vm327 = vcmask 1043456
    %v329 = vsel %vm327, %v320, 0
    %v332 = vsel %vm327, %v321, 0
    %v335 = vsel %vm327, %v322, 0
    %337 = vmatprep.subr.bf16.mxu0 0
    %338 = vmatpush1.bf16.msra.mxu0 0
    %339 = vmatprep.subr.bf16.mxu0 0
    %340 = vmatpush1.bf16.msra.mxu0 0
    %341 = vmatprep.subr.bf16.mxu0 0
    %342 = vmatpush1.bf16.msra.mxu0 0
    %343 = vmatprep.subr.bf16.mxu0 0
    %344 = vmatpush1.bf16.msra.mxu0 0
    %345 = vmatprep.subr.bf16.mxu0 0
    %346 = vmatpush1.bf16.msra.mxu0 0
    %347 = vmatprep.subr.bf16.mxu0 0
    %348 = vmatpush1.bf16.msra.mxu0 0
    %349 = vmatprep.subr.bf16.mxu0 0
    %350 = vmatpush1.bf16.msra.mxu0 0
    %351 = vmatprep.subr.bf16.mxu0 %v332
    %352 = vmatpush1.bf16.msra.mxu0 %v329
    %353 = vmatprep.subr.bf16.mxu0 0
    %354 = vmatpush2.bf16.msra.mxu0 0
    %355 = vmatprep.subr.bf16.mxu0 0
    %356 = vmatpush2.bf16.msra.mxu0 0
    %357 = vmatprep.subr.bf16.mxu0 0
    %358 = vmatpush2.bf16.msra.mxu0 0
    %359 = vmatprep.subr.bf16.mxu0 0
    %360 = vmatpush2.bf16.msra.mxu0 0
    %361 = vmatprep.subr.bf16.mxu0 0
    %362 = vmatpush2.bf16.msra.mxu0 0
    %363 = vmatprep.subr.bf16.mxu0 0
    %364 = vmatpush2.bf16.msra.mxu0 0
    %365 = vmatprep.subr.bf16.mxu0 0
    %366 = vmatpush2.bf16.msra.mxu0 0
    %367 = vmatprep.subr.bf16.mxu0 0
    %368 = vmatpush2.bf16.msra.mxu0 0
    %369 = vmatprep.mubr.bf16.mxu0 0
    %370 = vmatmul.mubr.bf16.gmra.mxu0 %v325
    %v371 = vpop.f32.mrf.mxu0
    %v372 = vadd.f32 0.0, %v371
    %v373 = vpop.f32.mrf.mxu0
    %v374 = vadd.f32 0.0, %v373
    %v375 = vpop.f32.mrf.mxu0
    %v376 = vpop.f32.mrf.mxu0
    %377 = vdwg.mxu0
    %378 = vmatprep.subr.bf16.mxu0 0
    %379 = vmatpush1.bf16.msra.mxu0 0
    %380 = vmatprep.subr.bf16.mxu0 0
    %381 = vmatpush1.bf16.msra.mxu0 0
    %382 = vmatprep.subr.bf16.mxu0 0
    %383 = vmatpush1.bf16.msra.mxu0 0
    %384 = vmatprep.subr.bf16.mxu0 0
    %385 = vmatpush1.bf16.msra.mxu0 0
    %386 = vmatprep.subr.bf16.mxu0 0
    %387 = vmatpush1.bf16.msra.mxu0 0
    %388 = vmatprep.subr.bf16.mxu0 0
    %389 = vmatpush1.bf16.msra.mxu0 0
    %390 = vmatprep.subr.bf16.mxu0 0
    %391 = vmatpush1.bf16.msra.mxu0 0
    %392 = vmatprep.subr.bf16.mxu0 0
    %393 = vmatpush1.bf16.msra.mxu0 %v335
    %394 = vmatprep.subr.bf16.mxu0 0
    %395 = vmatpush2.bf16.msra.mxu0 0
    %396 = vmatprep.subr.bf16.mxu0 0
    %397 = vmatpush2.bf16.msra.mxu0 0
    %398 = vmatprep.subr.bf16.mxu0 0
    %399 = vmatpush2.bf16.msra.mxu0 0
    %400 = vmatprep.subr.bf16.mxu0 0
    %401 = vmatpush2.bf16.msra.mxu0 0
    %402 = vmatprep.subr.bf16.mxu0 0
    %403 = vmatpush2.bf16.msra.mxu0 0
    %404 = vmatprep.subr.bf16.mxu0 0
    %405 = vmatpush2.bf16.msra.mxu0 0
    %406 = vmatprep.subr.bf16.mxu0 0
    %407 = vmatpush2.bf16.msra.mxu0 0
    %408 = vmatprep.subr.bf16.mxu0 0
    %409 = vmatpush2.bf16.msra.mxu0 0
    %410 = vmatprep.mubr.bf16.mxu0 0
    %411 = vmatmul.mubr.bf16.gmra.mxu0 %v325
    %v412 = vpop.f32.mrf.mxu0
    %v413 = vadd.f32 0.0, %v412
    %v414 = vpop.f32.mrf.mxu0
    %v415 = vpop.f32.mrf.mxu0
    %v416 = vpop.f32.mrf.mxu0
    %417 = vdwg.mxu0
    %v418 = vadd.f32 %v222, %v372
    %v419 = vmul.f32 %v418, 0.5
    %v420 = vtanh.pop %v419
    %v421 = vadd.f32 %v420, 1.0
    %v422 = vmul.f32 %v421, 0.5
    %v423 = vadd.f32 %v224, %v374
    %v424 = vmul.f32 %v423, 0.5
    %v425 = vtanh.pop %v424
    %v426 = vadd.f32 %v425, 1.0
    %v427 = vmul.f32 %v426, 0.5
    %v429 = vlaneseq
    %v430 = vshrl.u32 %v429, 7
    %v431 = vsub.s32 0, %v430
    %v432 = vrot.slane %v69, %v431
    %v434 = vadd.f32 %v413, %v432
    %v435 = vmul.f32 %v422, %v434
    %v436 = vadd.f32 %v299, %v435
    %v437 = vtanh.pop %v436
    %v438 = vsub.f32 %v312, %v437
    %v439 = vmul.f32 %v427, %v438
    %v440 = vadd.f32 %v437, %v439
    %v441 = vpack.c.bf16 %v440, %v440
    %v443 = vsel %vm323, %v441, 0
    %445 = vmatprep.subr.bf16.mxu0 0
    %446 = vmatpush1.bf16.msra.mxu0 0
    %447 = vmatprep.subr.bf16.mxu0 0
    %448 = vmatpush1.bf16.msra.mxu0 0
    %449 = vmatprep.subr.bf16.mxu0 0
    %450 = vmatpush1.bf16.msra.mxu0 0
    %451 = vmatprep.subr.bf16.mxu0 0
    %452 = vmatpush1.bf16.msra.mxu0 0
    %453 = vmatprep.subr.bf16.mxu0 0
    %454 = vmatpush1.bf16.msra.mxu0 0
    %455 = vmatprep.subr.bf16.mxu0 0
    %456 = vmatpush1.bf16.msra.mxu0 0
    %457 = vmatprep.subr.bf16.mxu0 0
    %458 = vmatpush1.bf16.msra.mxu0 0
    %459 = vmatprep.subr.bf16.mxu0 %v332
    %460 = vmatpush1.bf16.msra.mxu0 %v329
    %461 = vmatprep.subr.bf16.mxu0 0
    %462 = vmatpush2.bf16.msra.mxu0 0
    %463 = vmatprep.subr.bf16.mxu0 0
    %464 = vmatpush2.bf16.msra.mxu0 0
    %465 = vmatprep.subr.bf16.mxu0 0
    %466 = vmatpush2.bf16.msra.mxu0 0
    %467 = vmatprep.subr.bf16.mxu0 0
    %468 = vmatpush2.bf16.msra.mxu0 0
    %469 = vmatprep.subr.bf16.mxu0 0
    %470 = vmatpush2.bf16.msra.mxu0 0
    %471 = vmatprep.subr.bf16.mxu0 0
    %472 = vmatpush2.bf16.msra.mxu0 0
    %473 = vmatprep.subr.bf16.mxu0 0
    %474 = vmatpush2.bf16.msra.mxu0 0
    %475 = vmatprep.subr.bf16.mxu0 0
    %476 = vmatpush2.bf16.msra.mxu0 0
    %477 = vmatprep.mubr.bf16.mxu0 0
    %478 = vmatmul.mubr.bf16.gmra.mxu0 %v443
    %v479 = vpop.f32.mrf.mxu0
    %v480 = vadd.f32 0.0, %v479
    %v481 = vpop.f32.mrf.mxu0
    %v482 = vadd.f32 0.0, %v481
    %v483 = vpop.f32.mrf.mxu0
    %v484 = vpop.f32.mrf.mxu0
    %485 = vdwg.mxu0
    %486 = vmatprep.subr.bf16.mxu0 0
    %487 = vmatpush1.bf16.msra.mxu0 0
    %488 = vmatprep.subr.bf16.mxu0 0
    %489 = vmatpush1.bf16.msra.mxu0 0
    %490 = vmatprep.subr.bf16.mxu0 0
    %491 = vmatpush1.bf16.msra.mxu0 0
    %492 = vmatprep.subr.bf16.mxu0 0
    %493 = vmatpush1.bf16.msra.mxu0 0
    %494 = vmatprep.subr.bf16.mxu0 0
    %495 = vmatpush1.bf16.msra.mxu0 0
    %496 = vmatprep.subr.bf16.mxu0 0
    %497 = vmatpush1.bf16.msra.mxu0 0
    %498 = vmatprep.subr.bf16.mxu0 0
    %499 = vmatpush1.bf16.msra.mxu0 0
    %500 = vmatprep.subr.bf16.mxu0 0
    %501 = vmatpush1.bf16.msra.mxu0 %v335
    %502 = vmatprep.subr.bf16.mxu0 0
    %503 = vmatpush2.bf16.msra.mxu0 0
    %504 = vmatprep.subr.bf16.mxu0 0
    %505 = vmatpush2.bf16.msra.mxu0 0
    %506 = vmatprep.subr.bf16.mxu0 0
    %507 = vmatpush2.bf16.msra.mxu0 0
    %508 = vmatprep.subr.bf16.mxu0 0
    %509 = vmatpush2.bf16.msra.mxu0 0
    %510 = vmatprep.subr.bf16.mxu0 0
    %511 = vmatpush2.bf16.msra.mxu0 0
    %512 = vmatprep.subr.bf16.mxu0 0
    %513 = vmatpush2.bf16.msra.mxu0 0
    %514 = vmatprep.subr.bf16.mxu0 0
    %515 = vmatpush2.bf16.msra.mxu0 0
    %516 = vmatprep.subr.bf16.mxu0 0
    %517 = vmatpush2.bf16.msra.mxu0 0
    %518 = vmatprep.mubr.bf16.mxu0 0
    %519 = vmatmul.mubr.bf16.gmra.mxu0 %v443
    %v520 = vpop.f32.mrf.mxu0
    %v521 = vadd.f32 0.0, %v520
    %v522 = vpop.f32.mrf.mxu0
    %v523 = vpop.f32.mrf.mxu0
    %v524 = vpop.f32.mrf.mxu0
    %525 = vdwg.mxu0
    %v527 = vrot.slane %v480, 6
    %v529 = vadd.f32 %v222, %v527
    %v530 = vmul.f32 %v529, 0.5
    %v531 = vtanh.pop %v530
    %v532 = vadd.f32 %v531, 1.0
    %v533 = vmul.f32 %v532, 0.5
    %v535 = vrot.slane %v482, 6
    %v537 = vadd.f32 %v224, %v535
    %v538 = vmul.f32 %v537, 0.5
    %v539 = vtanh.pop %v538
    %v540 = vadd.f32 %v539, 1.0
    %v541 = vmul.f32 %v540, 0.5
    %v542 = vadd.f32 %v521, %v432
    %v544 = vrot.slane %v542, 6
    %v546 = vmul.f32 %v533, %v544
    %v547 = vadd.f32 %v299, %v546
    %v548 = vtanh.pop %v547
    %v550 = vrot.slane %v548, 2
    %v552 = vsub.f32 %v440, %v550
    %v554 = vrot.slane %v552, 6
    %v556 = vmul.f32 %v541, %v554
    %v557 = vadd.f32 %v548, %v556
    %v558 = vpack.c.bf16 %v557, %v557
    %v560 = vrot.slane %v558, 1
    %v562 = vsel %vm323, %v560, 0
    %564 = vmatprep.subr.bf16.mxu0 0
    %565 = vmatpush1.bf16.msra.mxu0 0
    %566 = vmatprep.subr.bf16.mxu0 0
    %567 = vmatpush1.bf16.msra.mxu0 0
    %568 = vmatprep.subr.bf16.mxu0 0
    %569 = vmatpush1.bf16.msra.mxu0 0
    %570 = vmatprep.subr.bf16.mxu0 0
    %571 = vmatpush1.bf16.msra.mxu0 0
    %572 = vmatprep.subr.bf16.mxu0 0
    %573 = vmatpush1.bf16.msra.mxu0 0
    %574 = vmatprep.subr.bf16.mxu0 0
    %575 = vmatpush1.bf16.msra.mxu0 0
    %576 = vmatprep.subr.bf16.mxu0 0
    %577 = vmatpush1.bf16.msra.mxu0 0
    %578 = vmatprep.subr.bf16.mxu0 %v332
    %579 = vmatpush1.bf16.msra.mxu0 %v329
    %580 = vmatprep.subr.bf16.mxu0 0
    %581 = vmatpush2.bf16.msra.mxu0 0
    %582 = vmatprep.subr.bf16.mxu0 0
    %583 = vmatpush2.bf16.msra.mxu0 0
    %584 = vmatprep.subr.bf16.mxu0 0
    %585 = vmatpush2.bf16.msra.mxu0 0
    %586 = vmatprep.subr.bf16.mxu0 0
    %587 = vmatpush2.bf16.msra.mxu0 0
    %588 = vmatprep.subr.bf16.mxu0 0
    %589 = vmatpush2.bf16.msra.mxu0 0
    %590 = vmatprep.subr.bf16.mxu0 0
    %591 = vmatpush2.bf16.msra.mxu0 0
    %592 = vmatprep.subr.bf16.mxu0 0
    %593 = vmatpush2.bf16.msra.mxu0 0
    %594 = vmatprep.subr.bf16.mxu0 0
    %595 = vmatpush2.bf16.msra.mxu0 0
    %596 = vmatprep.mubr.bf16.mxu0 0
    %597 = vmatmul.mubr.bf16.gmra.mxu0 %v562
    %v598 = vpop.f32.mrf.mxu0
    %v599 = vadd.f32 0.0, %v598
    %v600 = vpop.f32.mrf.mxu0
    %v601 = vadd.f32 0.0, %v600
    %v602 = vpop.f32.mrf.mxu0
    %v603 = vpop.f32.mrf.mxu0
    %604 = vdwg.mxu0
    %605 = vmatprep.subr.bf16.mxu0 0
    %606 = vmatpush1.bf16.msra.mxu0 0
    %607 = vmatprep.subr.bf16.mxu0 0
    %608 = vmatpush1.bf16.msra.mxu0 0
    %609 = vmatprep.subr.bf16.mxu0 0
    %610 = vmatpush1.bf16.msra.mxu0 0
    %611 = vmatprep.subr.bf16.mxu0 0
    %612 = vmatpush1.bf16.msra.mxu0 0
    %613 = vmatprep.subr.bf16.mxu0 0
    %614 = vmatpush1.bf16.msra.mxu0 0
    %615 = vmatprep.subr.bf16.mxu0 0
    %616 = vmatpush1.bf16.msra.mxu0 0
    %617 = vmatprep.subr.bf16.mxu0 0
    %618 = vmatpush1.bf16.msra.mxu0 0
    %619 = vmatprep.subr.bf16.mxu0 0
    %620 = vmatpush1.bf16.msra.mxu0 %v335
    %621 = vmatprep.subr.bf16.mxu0 0
    %622 = vmatpush2.bf16.msra.mxu0 0
    %623 = vmatprep.subr.bf16.mxu0 0
    %624 = vmatpush2.bf16.msra.mxu0 0
    %625 = vmatprep.subr.bf16.mxu0 0
    %626 = vmatpush2.bf16.msra.mxu0 0
    %627 = vmatprep.subr.bf16.mxu0 0
    %628 = vmatpush2.bf16.msra.mxu0 0
    %629 = vmatprep.subr.bf16.mxu0 0
    %630 = vmatpush2.bf16.msra.mxu0 0
    %631 = vmatprep.subr.bf16.mxu0 0
    %632 = vmatpush2.bf16.msra.mxu0 0
    %633 = vmatprep.subr.bf16.mxu0 0
    %634 = vmatpush2.bf16.msra.mxu0 0
    %635 = vmatprep.subr.bf16.mxu0 0
    %636 = vmatpush2.bf16.msra.mxu0 0
    %637 = vmatprep.mubr.bf16.mxu0 0
    %638 = vmatmul.mubr.bf16.gmra.mxu0 %v562
    %v639 = vpop.f32.mrf.mxu0
    %v640 = vadd.f32 0.0, %v639
    %v641 = vpop.f32.mrf.mxu0
    %v642 = vpop.f32.mrf.mxu0
    %v643 = vpop.f32.mrf.mxu0
    %644 = vdwg.mxu0
    %v646 = vrot.slane %v599, 4
    %v648 = vadd.f32 %v222, %v646
    %v649 = vmul.f32 %v648, 0.5
    %v650 = vtanh.pop %v649
    %v651 = vadd.f32 %v650, 1.0
    %v652 = vmul.f32 %v651, 0.5
    %v654 = vrot.slane %v601, 4
    %v656 = vadd.f32 %v224, %v654
    %v657 = vmul.f32 %v656, 0.5
    %v658 = vtanh.pop %v657
    %v659 = vadd.f32 %v658, 1.0
    %v660 = vmul.f32 %v659, 0.5
    %v661 = vadd.f32 %v640, %v432
    %v663 = vrot.slane %v661, 4
    %v665 = vmul.f32 %v652, %v663
    %v666 = vadd.f32 %v299, %v665
    %v667 = vtanh.pop %v666
    %v669 = vrot.slane %v667, 2
    %v671 = vsub.f32 %v557, %v669
    %v673 = vrot.slane %v671, 6
    %v675 = vmul.f32 %v660, %v673
    %v676 = vadd.f32 %v667, %v675
    %v677 = vpack.c.bf16 %v676, %v676
    %v679 = vrot.slane %v677, 2
    %v681 = vsel %vm323, %v679, 0
    %683 = vmatprep.subr.bf16.mxu0 0
    %684 = vmatpush1.bf16.msra.mxu0 0
    %685 = vmatprep.subr.bf16.mxu0 0
    %686 = vmatpush1.bf16.msra.mxu0 0
    %687 = vmatprep.subr.bf16.mxu0 0
    %688 = vmatpush1.bf16.msra.mxu0 0
    %689 = vmatprep.subr.bf16.mxu0 0
    %690 = vmatpush1.bf16.msra.mxu0 0
    %691 = vmatprep.subr.bf16.mxu0 0
    %692 = vmatpush1.bf16.msra.mxu0 0
    %693 = vmatprep.subr.bf16.mxu0 0
    %694 = vmatpush1.bf16.msra.mxu0 0
    %695 = vmatprep.subr.bf16.mxu0 0
    %696 = vmatpush1.bf16.msra.mxu0 0
    %697 = vmatprep.subr.bf16.mxu0 %v332
    %698 = vmatpush1.bf16.msra.mxu0 %v329
    %699 = vmatprep.subr.bf16.mxu0 0
    %700 = vmatpush2.bf16.msra.mxu0 0
    %701 = vmatprep.subr.bf16.mxu0 0
    %702 = vmatpush2.bf16.msra.mxu0 0
    %703 = vmatprep.subr.bf16.mxu0 0
    %704 = vmatpush2.bf16.msra.mxu0 0
    %705 = vmatprep.subr.bf16.mxu0 0
    %706 = vmatpush2.bf16.msra.mxu0 0
    %707 = vmatprep.subr.bf16.mxu0 0
    %708 = vmatpush2.bf16.msra.mxu0 0
    %709 = vmatprep.subr.bf16.mxu0 0
    %710 = vmatpush2.bf16.msra.mxu0 0
    %711 = vmatprep.subr.bf16.mxu0 0
    %712 = vmatpush2.bf16.msra.mxu0 0
    %713 = vmatprep.subr.bf16.mxu0 0
    %714 = vmatpush2.bf16.msra.mxu0 0
    %715 = vmatprep.mubr.bf16.mxu0 0
    %716 = vmatmul.mubr.bf16.gmra.mxu0 %v681
    %v717 = vpop.f32.mrf.mxu0
    %v718 = vadd.f32 0.0, %v717
    %v719 = vpop.f32.mrf.mxu0
    %v720 = vadd.f32 0.0, %v719
    %v721 = vpop.f32.mrf.mxu0
    %v722 = vpop.f32.mrf.mxu0
    %723 = vdwg.mxu0
    %724 = vmatprep.subr.bf16.mxu0 0
    %725 = vmatpush1.bf16.msra.mxu0 0
    %726 = vmatprep.subr.bf16.mxu0 0
    %727 = vmatpush1.bf16.msra.mxu0 0
    %728 = vmatprep.subr.bf16.mxu0 0
    %729 = vmatpush1.bf16.msra.mxu0 0
    %730 = vmatprep.subr.bf16.mxu0 0
    %731 = vmatpush1.bf16.msra.mxu0 0
    %732 = vmatprep.subr.bf16.mxu0 0
    %733 = vmatpush1.bf16.msra.mxu0 0
    %734 = vmatprep.subr.bf16.mxu0 0
    %735 = vmatpush1.bf16.msra.mxu0 0
    %736 = vmatprep.subr.bf16.mxu0 0
    %737 = vmatpush1.bf16.msra.mxu0 0
    %738 = vmatprep.subr.bf16.mxu0 0
    %739 = vmatpush1.bf16.msra.mxu0 %v335
    %740 = vmatprep.subr.bf16.mxu0 0
    %741 = vmatpush2.bf16.msra.mxu0 0
    %742 = vmatprep.subr.bf16.mxu0 0
    %743 = vmatpush2.bf16.msra.mxu0 0
    %744 = vmatprep.subr.bf16.mxu0 0
    %745 = vmatpush2.bf16.msra.mxu0 0
    %746 = vmatprep.subr.bf16.mxu0 0
    %747 = vmatpush2.bf16.msra.mxu0 0
    %748 = vmatprep.subr.bf16.mxu0 0
    %749 = vmatpush2.bf16.msra.mxu0 0
    %750 = vmatprep.subr.bf16.mxu0 0
    %751 = vmatpush2.bf16.msra.mxu0 0
    %752 = vmatprep.subr.bf16.mxu0 0
    %753 = vmatpush2.bf16.msra.mxu0 0
    %754 = vmatprep.subr.bf16.mxu0 0
    %755 = vmatpush2.bf16.msra.mxu0 0
    %756 = vmatprep.mubr.bf16.mxu0 0
    %757 = vmatmul.mubr.bf16.gmra.mxu0 %v681
    %v758 = vpop.f32.mrf.mxu0
    %v759 = vadd.f32 0.0, %v758
    %v760 = vpop.f32.mrf.mxu0
    %v761 = vpop.f32.mrf.mxu0
    %v762 = vpop.f32.mrf.mxu0
    %763 = vdwg.mxu0
    %v765 = vrot.slane %v718, 2
    %v767 = vadd.f32 %v222, %v765
    %v768 = vmul.f32 %v767, 0.5
    %v769 = vtanh.pop %v768
    %v770 = vadd.f32 %v769, 1.0
    %v771 = vmul.f32 %v770, 0.5
    %v773 = vrot.slane %v720, 2
    %v775 = vadd.f32 %v224, %v773
    %v776 = vmul.f32 %v775, 0.5
    %v777 = vtanh.pop %v776
    %v778 = vadd.f32 %v777, 1.0
    %v779 = vmul.f32 %v778, 0.5
    %v780 = vadd.f32 %v759, %v432
    %v782 = vrot.slane %v780, 2
    %v784 = vmul.f32 %v771, %v782
    %v785 = vadd.f32 %v299, %v784
    %v786 = vtanh.pop %v785
    %v788 = vrot.slane %v786, 2
    %v790 = vsub.f32 %v676, %v788
    %v792 = vrot.slane %v790, 6
    %v794 = vmul.f32 %v779, %v792
    %v795 = vadd.f32 %v786, %v794
    %v796 = vpack.c.bf16 %v795, %v795
    %v798 = vrot.slane %v796, 3
    %v800 = vsel %vm323, %v798, 0
    %802 = vmatprep.subr.bf16.mxu0 0
    %803 = vmatpush1.bf16.msra.mxu0 0
    %804 = vmatprep.subr.bf16.mxu0 0
    %805 = vmatpush1.bf16.msra.mxu0 0
    %806 = vmatprep.subr.bf16.mxu0 0
    %807 = vmatpush1.bf16.msra.mxu0 0
    %808 = vmatprep.subr.bf16.mxu0 0
    %809 = vmatpush1.bf16.msra.mxu0 0
    %810 = vmatprep.subr.bf16.mxu0 0
    %811 = vmatpush1.bf16.msra.mxu0 0
    %812 = vmatprep.subr.bf16.mxu0 0
    %813 = vmatpush1.bf16.msra.mxu0 0
    %814 = vmatprep.subr.bf16.mxu0 0
    %815 = vmatpush1.bf16.msra.mxu0 0
    %816 = vmatprep.subr.bf16.mxu0 %v332
    %817 = vmatpush1.bf16.msra.mxu0 %v329
    %818 = vmatprep.subr.bf16.mxu0 0
    %819 = vmatpush2.bf16.msra.mxu0 0
    %820 = vmatprep.subr.bf16.mxu0 0
    %821 = vmatpush2.bf16.msra.mxu0 0
    %822 = vmatprep.subr.bf16.mxu0 0
    %823 = vmatpush2.bf16.msra.mxu0 0
    %824 = vmatprep.subr.bf16.mxu0 0
    %825 = vmatpush2.bf16.msra.mxu0 0
    %826 = vmatprep.subr.bf16.mxu0 0
    %827 = vmatpush2.bf16.msra.mxu0 0
    %828 = vmatprep.subr.bf16.mxu0 0
    %829 = vmatpush2.bf16.msra.mxu0 0
    %830 = vmatprep.subr.bf16.mxu0 0
    %831 = vmatpush2.bf16.msra.mxu0 0
    %832 = vmatprep.subr.bf16.mxu0 0
    %833 = vmatpush2.bf16.msra.mxu0 0
    %834 = vmatprep.mubr.bf16.mxu0 0
    %835 = vmatmul.mubr.bf16.gmra.mxu0 %v800
    %v836 = vpop.f32.mrf.mxu0
    %v837 = vadd.f32 0.0, %v836
    %v838 = vpop.f32.mrf.mxu0
    %v839 = vadd.f32 0.0, %v838
    %v840 = vpop.f32.mrf.mxu0
    %v841 = vpop.f32.mrf.mxu0
    %842 = vdwg.mxu0
    %843 = vmatprep.subr.bf16.mxu0 0
    %844 = vmatpush1.bf16.msra.mxu0 0
    %845 = vmatprep.subr.bf16.mxu0 0
    %846 = vmatpush1.bf16.msra.mxu0 0
    %847 = vmatprep.subr.bf16.mxu0 0
    %848 = vmatpush1.bf16.msra.mxu0 0
    %849 = vmatprep.subr.bf16.mxu0 0
    %850 = vmatpush1.bf16.msra.mxu0 0
    %851 = vmatprep.subr.bf16.mxu0 0
    %852 = vmatpush1.bf16.msra.mxu0 0
    %853 = vmatprep.subr.bf16.mxu0 0
    %854 = vmatpush1.bf16.msra.mxu0 0
    %855 = vmatprep.subr.bf16.mxu0 0
    %856 = vmatpush1.bf16.msra.mxu0 0
    %857 = vmatprep.subr.bf16.mxu0 0
    %858 = vmatpush1.bf16.msra.mxu0 %v335
    %859 = vmatprep.subr.bf16.mxu0 0
    %860 = vmatpush2.bf16.msra.mxu0 0
    %861 = vmatprep.subr.bf16.mxu0 0
    %862 = vmatpush2.bf16.msra.mxu0 0
    %863 = vmatprep.subr.bf16.mxu0 0
    %864 = vmatpush2.bf16.msra.mxu0 0
    %865 = vmatprep.subr.bf16.mxu0 0
    %866 = vmatpush2.bf16.msra.mxu0 0
    %867 = vmatprep.subr.bf16.mxu0 0
    %868 = vmatpush2.bf16.msra.mxu0 0
    %869 = vmatprep.subr.bf16.mxu0 0
    %870 = vmatpush2.bf16.msra.mxu0 0
    %871 = vmatprep.subr.bf16.mxu0 0
    %872 = vmatpush2.bf16.msra.mxu0 0
    %873 = vmatprep.subr.bf16.mxu0 0
    %874 = vmatpush2.bf16.msra.mxu0 0
    %875 = vmatprep.mubr.bf16.mxu0 0
    %876 = vmatmul.mubr.bf16.gmra.mxu0 %v800
    %v877 = vpop.f32.mrf.mxu0
    %v878 = vadd.f32 0.0, %v877
    %v879 = vpop.f32.mrf.mxu0
    %v880 = vpop.f32.mrf.mxu0
    %v881 = vpop.f32.mrf.mxu0
    %882 = vdwg.mxu0
    %v883 = vadd.f32 %v228, %v837
    %v884 = vmul.f32 %v883, 0.5
    %v885 = vtanh.pop %v884
    %v886 = vadd.f32 %v885, 1.0
    %v887 = vmul.f32 %v886, 0.5
    %v888 = vadd.f32 %v230, %v839
    %v889 = vmul.f32 %v888, 0.5
    %v890 = vtanh.pop %v889
    %v891 = vadd.f32 %v890, 1.0
    %v892 = vmul.f32 %v891, 0.5
    %v893 = vadd.f32 %v878, %v432
    %v894 = vmul.f32 %v887, %v893
    %v895 = vadd.f32 %v304, %v894
    %v896 = vtanh.pop %v895
    %v898 = vrot.slane %v896, 2
    %v900 = vsub.f32 %v795, %v898
    %v902 = vrot.slane %v900, 6
    %v904 = vmul.f32 %v892, %v902
    %v905 = vadd.f32 %v896, %v904
    %v906 = vpack.c.bf16 %v905, %v905
    %v908 = vsel %vm323, %v906, 0
    %910 = vmatprep.subr.bf16.mxu0 0
    %911 = vmatpush1.bf16.msra.mxu0 0
    %912 = vmatprep.subr.bf16.mxu0 0
    %913 = vmatpush1.bf16.msra.mxu0 0
    %914 = vmatprep.subr.bf16.mxu0 0
    %915 = vmatpush1.bf16.msra.mxu0 0
    %916 = vmatprep.subr.bf16.mxu0 0
    %917 = vmatpush1.bf16.msra.mxu0 0
    %918 = vmatprep.subr.bf16.mxu0 0
    %919 = vmatpush1.bf16.msra.mxu0 0
    %920 = vmatprep.subr.bf16.mxu0 0
    %921 = vmatpush1.bf16.msra.mxu0 0
    %922 = vmatprep.subr.bf16.mxu0 0
    %923 = vmatpush1.bf16.msra.mxu0 0
    %924 = vmatprep.subr.bf16.mxu0 %v332
    %925 = vmatpush1.bf16.msra.mxu0 %v329
    %926 = vmatprep.subr.bf16.mxu0 0
    %927 = vmatpush2.bf16.msra.mxu0 0
    %928 = vmatprep.subr.bf16.mxu0 0
    %929 = vmatpush2.bf16.msra.mxu0 0
    %930 = vmatprep.subr.bf16.mxu0 0
    %931 = vmatpush2.bf16.msra.mxu0 0
    %932 = vmatprep.subr.bf16.mxu0 0
    %933 = vmatpush2.bf16.msra.mxu0 0
    %934 = vmatprep.subr.bf16.mxu0 0
    %935 = vmatpush2.bf16.msra.mxu0 0
    %936 = vmatprep.subr.bf16.mxu0 0
    %937 = vmatpush2.bf16.msra.mxu0 0
    %938 = vmatprep.subr.bf16.mxu0 0
    %939 = vmatpush2.bf16.msra.mxu0 0
    %940 = vmatprep.subr.bf16.mxu0 0
    %941 = vmatpush2.bf16.msra.mxu0 0
    %942 = vmatprep.mubr.bf16.mxu0 0
    %943 = vmatmul.mubr.bf16.gmra.mxu0 %v908
    %v944 = vpop.f32.mrf.mxu0
    %v945 = vadd.f32 0.0, %v944
    %v946 = vpop.f32.mrf.mxu0
    %v947 = vadd.f32 0.0, %v946
    %v948 = vpop.f32.mrf.mxu0
    %v949 = vpop.f32.mrf.mxu0
    %950 = vdwg.mxu0
    %951 = vmatprep.subr.bf16.mxu0 0
    %952 = vmatpush1.bf16.msra.mxu0 0
    %953 = vmatprep.subr.bf16.mxu0 0
    %954 = vmatpush1.bf16.msra.mxu0 0
    %955 = vmatprep.subr.bf16.mxu0 0
    %956 = vmatpush1.bf16.msra.mxu0 0
    %957 = vmatprep.subr.bf16.mxu0 0
    %958 = vmatpush1.bf16.msra.mxu0 0
    %959 = vmatprep.subr.bf16.mxu0 0
    %960 = vmatpush1.bf16.msra.mxu0 0
    %961 = vmatprep.subr.bf16.mxu0 0
    %962 = vmatpush1.bf16.msra.mxu0 0
    %963 = vmatprep.subr.bf16.mxu0 0
    %964 = vmatpush1.bf16.msra.mxu0 0
    %965 = vmatprep.subr.bf16.mxu0 0
    %966 = vmatpush1.bf16.msra.mxu0 %v335
    %967 = vmatprep.subr.bf16.mxu0 0
    %968 = vmatpush2.bf16.msra.mxu0 0
    %969 = vmatprep.subr.bf16.mxu0 0
    %970 = vmatpush2.bf16.msra.mxu0 0
    %971 = vmatprep.subr.bf16.mxu0 0
    %972 = vmatpush2.bf16.msra.mxu0 0
    %973 = vmatprep.subr.bf16.mxu0 0
    %974 = vmatpush2.bf16.msra.mxu0 0
    %975 = vmatprep.subr.bf16.mxu0 0
    %976 = vmatpush2.bf16.msra.mxu0 0
    %977 = vmatprep.subr.bf16.mxu0 0
    %978 = vmatpush2.bf16.msra.mxu0 0
    %979 = vmatprep.subr.bf16.mxu0 0
    %980 = vmatpush2.bf16.msra.mxu0 0
    %981 = vmatprep.subr.bf16.mxu0 0
    %982 = vmatpush2.bf16.msra.mxu0 0
    %983 = vmatprep.mubr.bf16.mxu0 0
    %984 = vmatmul.mubr.bf16.gmra.mxu0 %v908
    %v985 = vpop.f32.mrf.mxu0
    %v986 = vadd.f32 0.0, %v985
    %v987 = vpop.f32.mrf.mxu0
    %v988 = vpop.f32.mrf.mxu0
    %v989 = vpop.f32.mrf.mxu0
    %990 = vdwg.mxu0
    %v992 = vrot.slane %v945, 6
    %v994 = vadd.f32 %v228, %v992
    %v995 = vmul.f32 %v994, 0.5
    %v996 = vtanh.pop %v995
    %v997 = vadd.f32 %v996, 1.0
    %v998 = vmul.f32 %v997, 0.5
    %v1000 = vrot.slane %v947, 6
    %v1002 = vadd.f32 %v230, %v1000
    %v1003 = vmul.f32 %v1002, 0.5
    %v1004 = vtanh.pop %v1003
    %v1005 = vadd.f32 %v1004, 1.0
    %v1006 = vmul.f32 %v1005, 0.5
    %v1007 = vadd.f32 %v986, %v432
    %v1009 = vrot.slane %v1007, 6
    %v1011 = vmul.f32 %v998, %v1009
    %v1012 = vadd.f32 %v304, %v1011
    %v1013 = vtanh.pop %v1012
    %v1015 = vrot.slane %v1013, 2
    %v1017 = vsub.f32 %v905, %v1015
    %v1019 = vrot.slane %v1017, 6
    %v1021 = vmul.f32 %v1006, %v1019
    %v1022 = vadd.f32 %v1013, %v1021
    %v1023 = vpack.c.bf16 %v1022, %v1022
    %v1025 = vrot.slane %v1023, 1
    %v1027 = vsel %vm323, %v1025, 0
    %1029 = vmatprep.subr.bf16.mxu0 0
    %1030 = vmatpush1.bf16.msra.mxu0 0
    %1031 = vmatprep.subr.bf16.mxu0 0
    %1032 = vmatpush1.bf16.msra.mxu0 0
    %1033 = vmatprep.subr.bf16.mxu0 0
    %1034 = vmatpush1.bf16.msra.mxu0 0
    %1035 = vmatprep.subr.bf16.mxu0 0
    %1036 = vmatpush1.bf16.msra.mxu0 0
    %1037 = vmatprep.subr.bf16.mxu0 0
    %1038 = vmatpush1.bf16.msra.mxu0 0
    %1039 = vmatprep.subr.bf16.mxu0 0
    %1040 = vmatpush1.bf16.msra.mxu0 0
    %1041 = vmatprep.subr.bf16.mxu0 0
    %1042 = vmatpush1.bf16.msra.mxu0 0
    %1043 = vmatprep.subr.bf16.mxu0 %v332
    %1044 = vmatpush1.bf16.msra.mxu0 %v329
    %1045 = vmatprep.subr.bf16.mxu0 0
    %1046 = vmatpush2.bf16.msra.mxu0 0
    %1047 = vmatprep.subr.bf16.mxu0 0
    %1048 = vmatpush2.bf16.msra.mxu0 0
    %1049 = vmatprep.subr.bf16.mxu0 0
    %1050 = vmatpush2.bf16.msra.mxu0 0
    %1051 = vmatprep.subr.bf16.mxu0 0
    %1052 = vmatpush2.bf16.msra.mxu0 0
    %1053 = vmatprep.subr.bf16.mxu0 0
    %1054 = vmatpush2.bf16.msra.mxu0 0
    %1055 = vmatprep.subr.bf16.mxu0 0
    %1056 = vmatpush2.bf16.msra.mxu0 0
    %1057 = vmatprep.subr.bf16.mxu0 0
    %1058 = vmatpush2.bf16.msra.mxu0 0
    %1059 = vmatprep.subr.bf16.mxu0 0
    %1060 = vmatpush2.bf16.msra.mxu0 0
    %1061 = vmatprep.mubr.bf16.mxu0 0
    %1062 = vmatmul.mubr.bf16.gmra.mxu0 %v1027
    %v1063 = vpop.f32.mrf.mxu0
    %v1064 = vadd.f32 0.0, %v1063
    %v1065 = vpop.f32.mrf.mxu0
    %v1066 = vadd.f32 0.0, %v1065
    %v1067 = vpop.f32.mrf.mxu0
    %v1068 = vpop.f32.mrf.mxu0
    %1069 = vdwg.mxu0
    %1070 = vmatprep.subr.bf16.mxu0 0
    %1071 = vmatpush1.bf16.msra.mxu0 0
    %1072 = vmatprep.subr.bf16.mxu0 0
    %1073 = vmatpush1.bf16.msra.mxu0 0
    %1074 = vmatprep.subr.bf16.mxu0 0
    %1075 = vmatpush1.bf16.msra.mxu0 0
    %1076 = vmatprep.subr.bf16.mxu0 0
    %1077 = vmatpush1.bf16.msra.mxu0 0
    %1078 = vmatprep.subr.bf16.mxu0 0
    %1079 = vmatpush1.bf16.msra.mxu0 0
    %1080 = vmatprep.subr.bf16.mxu0 0
    %1081 = vmatpush1.bf16.msra.mxu0 0
    %1082 = vmatprep.subr.bf16.mxu0 0
    %1083 = vmatpush1.bf16.msra.mxu0 0
    %1084 = vmatprep.subr.bf16.mxu0 0
    %1085 = vmatpush1.bf16.msra.mxu0 %v335
    %1086 = vmatprep.subr.bf16.mxu0 0
    %1087 = vmatpush2.bf16.msra.mxu0 0
    %1088 = vmatprep.subr.bf16.mxu0 0
    %1089 = vmatpush2.bf16.msra.mxu0 0
    %1090 = vmatprep.subr.bf16.mxu0 0
    %1091 = vmatpush2.bf16.msra.mxu0 0
    %1092 = vmatprep.subr.bf16.mxu0 0
    %1093 = vmatpush2.bf16.msra.mxu0 0
    %1094 = vmatprep.subr.bf16.mxu0 0
    %1095 = vmatpush2.bf16.msra.mxu0 0
    %1096 = vmatprep.subr.bf16.mxu0 0
    %1097 = vmatpush2.bf16.msra.mxu0 0
    %1098 = vmatprep.subr.bf16.mxu0 0
    %1099 = vmatpush2.bf16.msra.mxu0 0
    %1100 = vmatprep.subr.bf16.mxu0 0
    %1101 = vmatpush2.bf16.msra.mxu0 0
    %1102 = vmatprep.mubr.bf16.mxu0 0
    %1103 = vmatmul.mubr.bf16.gmra.mxu0 %v1027
    %v1104 = vpop.f32.mrf.mxu0
    %v1105 = vadd.f32 0.0, %v1104
    %v1106 = vpop.f32.mrf.mxu0
    %v1107 = vpop.f32.mrf.mxu0
    %v1108 = vpop.f32.mrf.mxu0
    %1109 = vdwg.mxu0
    %v1111 = vrot.slane %v1064, 4
    %v1113 = vadd.f32 %v228, %v1111
    %v1114 = vmul.f32 %v1113, 0.5
    %v1115 = vtanh.pop %v1114
    %v1116 = vadd.f32 %v1115, 1.0
    %v1117 = vmul.f32 %v1116, 0.5
    %v1119 = vrot.slane %v1066, 4
    %v1121 = vadd.f32 %v230, %v1119
    %v1122 = vmul.f32 %v1121, 0.5
    %v1123 = vtanh.pop %v1122
    %v1124 = vadd.f32 %v1123, 1.0
    %v1125 = vmul.f32 %v1124, 0.5
    %v1126 = vadd.f32 %v1105, %v432
    %v1128 = vrot.slane %v1126, 4
    %v1130 = vmul.f32 %v1117, %v1128
    %v1131 = vadd.f32 %v304, %v1130
    %v1132 = vtanh.pop %v1131
    %v1134 = vrot.slane %v1132, 2
    %v1136 = vsub.f32 %v1022, %v1134
    %v1138 = vrot.slane %v1136, 6
    %v1140 = vmul.f32 %v1125, %v1138
    %v1141 = vadd.f32 %v1132, %v1140
    %v1142 = vpack.c.bf16 %v1141, %v1141
    %v1144 = vrot.slane %v1142, 2
    %v1146 = vsel %vm323, %v1144, 0
    %1148 = vmatprep.subr.bf16.mxu0 0
    %1149 = vmatpush1.bf16.msra.mxu0 0
    %1150 = vmatprep.subr.bf16.mxu0 0
    %1151 = vmatpush1.bf16.msra.mxu0 0
    %1152 = vmatprep.subr.bf16.mxu0 0
    %1153 = vmatpush1.bf16.msra.mxu0 0
    %1154 = vmatprep.subr.bf16.mxu0 0
    %1155 = vmatpush1.bf16.msra.mxu0 0
    %1156 = vmatprep.subr.bf16.mxu0 0
    %1157 = vmatpush1.bf16.msra.mxu0 0
    %1158 = vmatprep.subr.bf16.mxu0 0
    %1159 = vmatpush1.bf16.msra.mxu0 0
    %1160 = vmatprep.subr.bf16.mxu0 0
    %1161 = vmatpush1.bf16.msra.mxu0 0
    %1162 = vmatprep.subr.bf16.mxu0 %v332
    %1163 = vmatpush1.bf16.msra.mxu0 %v329
    %1164 = vmatprep.subr.bf16.mxu0 0
    %1165 = vmatpush2.bf16.msra.mxu0 0
    %1166 = vmatprep.subr.bf16.mxu0 0
    %1167 = vmatpush2.bf16.msra.mxu0 0
    %1168 = vmatprep.subr.bf16.mxu0 0
    %1169 = vmatpush2.bf16.msra.mxu0 0
    %1170 = vmatprep.subr.bf16.mxu0 0
    %1171 = vmatpush2.bf16.msra.mxu0 0
    %1172 = vmatprep.subr.bf16.mxu0 0
    %1173 = vmatpush2.bf16.msra.mxu0 0
    %1174 = vmatprep.subr.bf16.mxu0 0
    %1175 = vmatpush2.bf16.msra.mxu0 0
    %1176 = vmatprep.subr.bf16.mxu0 0
    %1177 = vmatpush2.bf16.msra.mxu0 0
    %1178 = vmatprep.subr.bf16.mxu0 0
    %1179 = vmatpush2.bf16.msra.mxu0 0
    %1180 = vmatprep.mubr.bf16.mxu0 0
    %1181 = vmatmul.mubr.bf16.gmra.mxu0 %v1146
    %v1182 = vpop.f32.mrf.mxu0
    %v1183 = vadd.f32 0.0, %v1182
    %v1184 = vpop.f32.mrf.mxu0
    %v1185 = vadd.f32 0.0, %v1184
    %v1186 = vpop.f32.mrf.mxu0
    %v1187 = vpop.f32.mrf.mxu0
    %1188 = vdwg.mxu0
    %1189 = vmatprep.subr.bf16.mxu0 0
    %1190 = vmatpush1.bf16.msra.mxu0 0
    %1191 = vmatprep.subr.bf16.mxu0 0
    %1192 = vmatpush1.bf16.msra.mxu0 0
    %1193 = vmatprep.subr.bf16.mxu0 0
    %1194 = vmatpush1.bf16.msra.mxu0 0
    %1195 = vmatprep.subr.bf16.mxu0 0
    %1196 = vmatpush1.bf16.msra.mxu0 0
    %1197 = vmatprep.subr.bf16.mxu0 0
    %1198 = vmatpush1.bf16.msra.mxu0 0
    %1199 = vmatprep.subr.bf16.mxu0 0
    %1200 = vmatpush1.bf16.msra.mxu0 0
    %1201 = vmatprep.subr.bf16.mxu0 0
    %1202 = vmatpush1.bf16.msra.mxu0 0
    %1203 = vmatprep.subr.bf16.mxu0 0
    %1204 = vmatpush1.bf16.msra.mxu0 %v335
    %1205 = vmatprep.subr.bf16.mxu0 0
    %1206 = vmatpush2.bf16.msra.mxu0 0
    %1207 = vmatprep.subr.bf16.mxu0 0
    %1208 = vmatpush2.bf16.msra.mxu0 0
    %1209 = vmatprep.subr.bf16.mxu0 0
    %1210 = vmatpush2.bf16.msra.mxu0 0
    %1211 = vmatprep.subr.bf16.mxu0 0
    %1212 = vmatpush2.bf16.msra.mxu0 0
    %1213 = vmatprep.subr.bf16.mxu0 0
    %1214 = vmatpush2.bf16.msra.mxu0 0
    %1215 = vmatprep.subr.bf16.mxu0 0
    %1216 = vmatpush2.bf16.msra.mxu0 0
    %1217 = vmatprep.subr.bf16.mxu0 0
    %1218 = vmatpush2.bf16.msra.mxu0 0
    %1219 = vmatprep.subr.bf16.mxu0 0
    %1220 = vmatpush2.bf16.msra.mxu0 0
    %1221 = vmatprep.mubr.bf16.mxu0 0
    %1222 = vmatmul.mubr.bf16.gmra.mxu0 %v1146
    %v1223 = vpop.f32.mrf.mxu0
    %v1224 = vadd.f32 0.0, %v1223
    %v1225 = vpop.f32.mrf.mxu0
    %v1226 = vpop.f32.mrf.mxu0
    %v1227 = vpop.f32.mrf.mxu0
    %1228 = vdwg.mxu0
    %v1230 = vrot.slane %v1183, 2
    %v1232 = vadd.f32 %v228, %v1230
    %v1233 = vmul.f32 %v1232, 0.5
    %v1234 = vtanh.pop %v1233
    %v1235 = vadd.f32 %v1234, 1.0
    %v1236 = vmul.f32 %v1235, 0.5
    %v1238 = vrot.slane %v1185, 2
    %v1240 = vadd.f32 %v230, %v1238
    %v1241 = vmul.f32 %v1240, 0.5
    %v1242 = vtanh.pop %v1241
    %v1243 = vadd.f32 %v1242, 1.0
    %v1244 = vmul.f32 %v1243, 0.5
    %v1245 = vadd.f32 %v1224, %v432
    %v1247 = vrot.slane %v1245, 2
    %v1249 = vmul.f32 %v1236, %v1247
    %v1250 = vadd.f32 %v304, %v1249
    %v1251 = vtanh.pop %v1250
    %v1253 = vrot.slane %v1251, 2
    %v1255 = vsub.f32 %v1141, %v1253
    %v1257 = vrot.slane %v1255, 6
    %v1259 = vmul.f32 %v1244, %v1257
    %v1260 = vadd.f32 %v1251, %v1259
    %vm1261 = vcmask 1041408
    %v1262 = vsel %vm1261, %v440, %v557
    %v1263 = vsel %vm327, %v1262, %v676
    %vm1264 = vcmask 1045504
    %v1265 = vsel %vm1264, %v1263, %v795
    %v1266 = vsel %vm1261, %v905, %v1022
    %v1267 = vsel %vm327, %v1266, %v1141
    %v1268 = vsel %vm1264, %v1267, %v1260
    %v1269 = vld [vmem:[#allocation4] sm:$0xff]
    %v1270 = vld [vmem:[#allocation6] sm:$0x1]
    %v1272 = vlaneseq
    %v1273 = vshrl.u32 %v1272, 7
    %v1274 = vsub.s32 0, %v1273
    %v1275 = vrot.slane %v1270, %v1274
    %v1278 = vsel %vm323, %v1265, 0
    %v1281 = vsel %vm323, %v1268, 0
    %1283 = vmatprep.subr.mxu0 0.0
    %1284 = vmatpush1.msra.mxu0 0.0
    %1285 = vmatprep.subr.mxu0 0.0
    %1286 = vmatpush1.msra.mxu0 0.0
    %1287 = vmatprep.subr.mxu0 0.0
    %1288 = vmatpush1.msra.mxu0 0.0
    %1289 = vmatprep.subr.mxu0 0.0
    %1290 = vmatpush1.msra.mxu0 0.0
    %1291 = vmatprep.subr.mxu0 0.0
    %1292 = vmatpush1.msra.mxu0 0.0
    %1293 = vmatprep.subr.mxu0 0.0
    %1294 = vmatpush1.msra.mxu0 0.0
    %1295 = vmatprep.subr.mxu0 0.0
    %1296 = vmatpush1.msra.mxu0 0.0
    %1297 = vmatprep.subr.mxu0 0.0
    %1298 = vmatpush1.msra.mxu0 0.0
    %1299 = vmatprep.subr.mxu0 0.0
    %1300 = vmatpush1.msra.mxu0 0.0
    %1301 = vmatprep.subr.mxu0 0.0
    %1302 = vmatpush1.msra.mxu0 0.0
    %1303 = vmatprep.subr.mxu0 0.0
    %1304 = vmatpush1.msra.mxu0 0.0
    %1305 = vmatprep.subr.mxu0 0.0
    %1306 = vmatpush1.msra.mxu0 0.0
    %1307 = vmatprep.subr.mxu0 0.0
    %1308 = vmatpush1.msra.mxu0 0.0
    %1309 = vmatprep.subr.mxu0 0.0
    %1310 = vmatpush1.msra.mxu0 0.0
    %1311 = vmatprep.subr.mxu0 0.0
    %1312 = vmatpush1.msra.mxu0 0.0
    %1313 = vmatprep.subr.mxu0 0.0
    %1314 = vmatpush1.msra.mxu0 %v1269
    %1315 = vmatprep.subr.mxu0 0.0
    %1316 = vmatpush2.msra.mxu0 0.0
    %1317 = vmatprep.subr.mxu0 0.0
    %1318 = vmatpush2.msra.mxu0 0.0
    %1319 = vmatprep.subr.mxu0 0.0
    %1320 = vmatpush2.msra.mxu0 0.0
    %1321 = vmatprep.subr.mxu0 0.0
    %1322 = vmatpush2.msra.mxu0 0.0
    %1323 = vmatprep.subr.mxu0 0.0
    %1324 = vmatpush2.msra.mxu0 0.0
    %1325 = vmatprep.subr.mxu0 0.0
    %1326 = vmatpush2.msra.mxu0 0.0
    %1327 = vmatprep.subr.mxu0 0.0
    %1328 = vmatpush2.msra.mxu0 0.0
    %1329 = vmatprep.subr.mxu0 0.0
    %1330 = vmatpush2.msra.mxu0 0.0
    %1331 = vmatprep.subr.mxu0 0.0
    %1332 = vmatpush2.msra.mxu0 0.0
    %1333 = vmatprep.subr.mxu0 0.0
    %1334 = vmatpush2.msra.mxu0 0.0
    %1335 = vmatprep.subr.mxu0 0.0
    %1336 = vmatpush2.msra.mxu0 0.0
    %1337 = vmatprep.subr.mxu0 0.0
    %1338 = vmatpush2.msra.mxu0 0.0
    %1339 = vmatprep.subr.mxu0 0.0
    %1340 = vmatpush2.msra.mxu0 0.0
    %1341 = vmatprep.subr.mxu0 0.0
    %1342 = vmatpush2.msra.mxu0 0.0
    %1343 = vmatprep.subr.mxu0 0.0
    %1344 = vmatpush2.msra.mxu0 0.0
    %1345 = vmatprep.subr.mxu0 0.0
    %1346 = vmatpush2.msra.mxu0 0.0
    %1347 = vmatprep.mubr.f32.mxu0 0.0
    %1348 = vmatmul.mubr.f32.gmra.mxu0 %v1278
    %v1349 = vpop.f32.mrf.mxu0
    %v1350 = vadd.f32 %v1275, %v1349
    %v1351 = vpop.f32.mrf.mxu0
    %1352 = vmatprep.mubr.f32.mxu0 0.0
    %1353 = vmatmul.mubr.f32.gmra.mxu0 %v1281
    %v1354 = vpop.f32.mrf.mxu0
    %v1355 = vadd.f32 %v1275, %v1354
    %v1356 = vpop.f32.mrf.mxu0
    %1357 = vdwg.mxu0
    %1358 = vst [vmem:[%s8] sm:$0xff] %v1350
    %1359 = vst [vmem:[%s8 + $0x8] sm:$0xff] %v1355
    %1360 = vst [vmem:[%s9 - $0x6] sm:$0xc0] %v1260
    // Predicated region
    $region46: #{environment_model_forward.1} parent=1 // pred_check
      _
    $region47: #{environment_model_forward.1} parent=1 // pred_check_branch
      %1362 = sbr.rel (0) target = $region49
    $region48: #{environment_model_forward.1} parent=1 // pred_region
      _
    $region49: #{environment_model_forward.1} parent=1 // pred_fallthru
      _
    // Predicated region
    $region50: #{environment_model_forward.1} parent=1 // pred_check
      _
    $region51: #{environment_model_forward.1} parent=1 // pred_check_branch
      %1364 = sbr.rel (0) target = $region53
    $region52: #{environment_model_forward.1} parent=1 // pred_region
      _
    $region53: #{environment_model_forward.1} parent=1 // pred_fallthru
      _
    // Predicated region
    $region54: #{environment_model_forward.1} parent=1 // pred_check
      _
    $region55: #{environment_model_forward.1} parent=1 // pred_check_branch
      %1366 = sbr.rel (0) target = $region57
    $region56: #{environment_model_forward.1} parent=1 // pred_region
      _
    $region57: #{environment_model_forward.1} parent=1 // pred_fallthru
      _
    // Predicated region
    $region58: #{environment_model_forward.1} parent=1 // pred_check
      _
    $region59: #{environment_model_forward.1} parent=1 // pred_check_branch
      %1368 = sbr.rel (0) target = $region61
    $region60: #{environment_model_forward.1} parent=1 // pred_region
      _
    $region61: #{environment_model_forward.1} parent=1 // pred_fallthru
      _
    %1369 = vsyncpa [#allocation3], 1
    %1370 = vsyncpa [#allocation5], 1

</llo_original>
